<compile_context>
chip_gen: v5e
topology: v5e:2x2
jax: 0.10.0
libtpu: 0.0.40
codegen_flags: <defaults>
</compile_context>

<pallas_src>
import functools

import jax
import jax.numpy as jnp
from jax.experimental import pallas as pl
from jax.experimental.pallas import tpu as pltpu

GATE_TILE_N = 768   # W2 output-channel tile (SE gate kernel)
MAIN_TILE_N = 512   # W3 output-channel tile (main conv+BN kernel)


def _round_up(x, m):
    return ((x + m - 1) // m) * m


# ----------------------------------------------------------------------------
# Parameter preparation: pad Cout to tile multiples and cast weights ONCE.
# Conv weights are stored as [Cin, Cout]; biases / BN params as [1, Cout].
# ----------------------------------------------------------------------------
def prepare_params(raw, *, tile_gate=GATE_TILE_N, tile_main=MAIN_TILE_N,
                   weight_dtype=jnp.bfloat16):
    c_out = raw["w3"].shape[1]
    cg = _round_up(c_out, tile_gate)
    cm = _round_up(c_out, tile_main)
    return dict(
        w1=raw["w1"].astype(weight_dtype),
        b1=raw["b1"].astype(jnp.float32),
        w2=jnp.pad(raw["w2"], ((0, 0), (0, cg - c_out))).astype(weight_dtype),
        b2=jnp.pad(raw["b2"], ((0, 0), (0, cg - c_out))).astype(jnp.float32),
        w3=jnp.pad(raw["w3"], ((0, 0), (0, cm - c_out))).astype(weight_dtype),
        gamma=jnp.pad(raw["gamma"], ((0, 0), (0, cm - c_out))).astype(jnp.float32),
        beta=jnp.pad(raw["beta"], ((0, 0), (0, cm - c_out))).astype(jnp.float32),
    )


# ----------------------------------------------------------------------------
# Fused SE gate:  gate = sigmoid(relu(x @ W1 + b1) @ W2 + b2)
# Single pallas_call.  Grid over W2 Cout tiles ("arbitrary" -> sequential, so
# the step-0 scratch init of h is guaranteed before any consumer step).
# ----------------------------------------------------------------------------
def _gate_kernel(x_ref, w1_ref, b1_ref, w2_ref, b2_ref, o_ref, h_ref):
    @pl.when(pl.program_id(0) == 0)
    def _():
        xv = x_ref[...].astype(w1_ref.dtype)
        h = jnp.dot(xv, w1_ref[...],
                    preferred_element_type=jnp.float32) + b1_ref[...]
        h_ref[...] = jnp.maximum(h, 0.0).astype(h_ref.dtype)      # ReLU

    s = jnp.dot(h_ref[...], w2_ref[...],
                preferred_element_type=jnp.float32) + b2_ref[...]
    o_ref[...] = jax.nn.sigmoid(s)


def se_gate(x_vec, w1, b1, w2, b2, *, tile_n=GATE_TILE_N):
    c_in, c_mid = w1.shape
    c_out_p = w2.shape[1]
    assert c_out_p % tile_n == 0
    return pl.pallas_call(
        _gate_kernel,
        out_shape=jax.ShapeDtypeStruct((1, c_out_p), jnp.float32),
        grid=(c_out_p // tile_n,),
        in_specs=[
            pl.BlockSpec((1, c_in), lambda j: (0, 0)),        # x (resident)
            pl.BlockSpec((c_in, c_mid), lambda j: (0, 0)),    # W1 (resident)
            pl.BlockSpec((1, c_mid), lambda j: (0, 0)),       # b1 (resident)
            pl.BlockSpec((c_mid, tile_n), lambda j: (0, j)),  # W2 tile
            pl.BlockSpec((1, tile_n), lambda j: (0, j)),      # b2 tile
        ],
        out_specs=pl.BlockSpec((1, tile_n), lambda j: (0, j)),
        scratch_shapes=[pltpu.VMEM((1, c_mid), w1.dtype)],    # h, persists
        compiler_params=pltpu.CompilerParams(
            dimension_semantics=("arbitrary",),
            vmem_limit_bytes=32 * 1024 * 1024),
    )(x_vec, w1, b1, w2, b2)


# ----------------------------------------------------------------------------
# Main path:  z = (x * gate) @ W3 ;  y = batchnorm(z)   (training-mode stats)
# Single grid axis over Cout tiles.  x_flat and gate are resident in VMEM
# (constant block index), W3 streams one full-depth [Cin, tile_n] slab per
# step (bf16 by default), and BN over the P = N*H*W rows is fused after the
# dot.  BN is per-channel, so channel tiling is exact.
# ----------------------------------------------------------------------------
def _main_kernel(x_ref, g_ref, w_ref, gamma_ref, beta_ref, o_ref, *, eps):
    xg = (x_ref[...] * g_ref[...]).astype(w_ref.dtype)         # (P,Cin)*(1,Cin)
    z = jnp.dot(xg, w_ref[...], preferred_element_type=jnp.float32)
    mean = jnp.mean(z, axis=0, keepdims=True)
    var = jnp.mean(jnp.square(z - mean), axis=0, keepdims=True)   # biased var
    y = (z - mean) * jax.lax.rsqrt(var + eps)
    o_ref[...] = (y * gamma_ref[...] + beta_ref[...]).astype(o_ref.dtype)


def scale_conv_bn(x_flat, gate, w3, gamma, beta, *, eps=1e-5,
                  tile_n=MAIN_TILE_N):
    p, c_in = x_flat.shape
    c_out_p = w3.shape[1]
    assert c_out_p % tile_n == 0

    bytes_accessed = int(
        x_flat.size * x_flat.dtype.itemsize
        + gate.size * gate.dtype.itemsize
        + w3.size * w3.dtype.itemsize
        + p * c_out_p * 4)

    kernel = functools.partial(_main_kernel, eps=eps)
    return pl.pallas_call(
        kernel,
        out_shape=jax.ShapeDtypeStruct((p, c_out_p), jnp.float32),
        grid=(c_out_p // tile_n,),
        in_specs=[
            pl.BlockSpec((p, c_in), lambda j: (0, 0)),        # x (resident)
            pl.BlockSpec((1, c_in), lambda j: (0, 0)),        # gate (resident)
            pl.BlockSpec((c_in, tile_n), lambda j: (0, j)),   # W3 slab
            pl.BlockSpec((1, tile_n), lambda j: (0, j)),      # gamma tile
            pl.BlockSpec((1, tile_n), lambda j: (0, j)),      # beta tile
        ],
        out_specs=pl.BlockSpec((p, tile_n), lambda j: (0, j)),
        compiler_params=pltpu.CompilerParams(
            dimension_semantics=("parallel",),
            vmem_limit_bytes=32 * 1024 * 1024),
        cost_estimate=pl.CostEstimate(
            flops=2 * p * c_in * c_out_p,
            transcendentals=0,
            bytes_accessed=bytes_accessed),
    )(x_flat, gate, w3, gamma, beta)


# ----------------------------------------------------------------------------
# Full module forward (wrapper: NCHW <-> [P, C] glue in plain JAX).
# params must come from prepare_params() (padded / cast ONCE, outside the hot
# path).
# ----------------------------------------------------------------------------
def module_forward(x336, x335, params, *, eps=1e-5,
                   tile_gate=GATE_TILE_N, tile_main=MAIN_TILE_N):
    n, c, h, w = x335.shape
    # TODO(synk): gate broadcast assumes N==1 (as in the original module); for
    # N>1 the gate would need a per-image row instead of a single (1,C) row.
    assert n == 1 and x336.shape == (n, c, 1, 1)

    x_vec = x336.reshape(1, c)
    gate = se_gate(x_vec, params["w1"], params["b1"],
                   params["w2"], params["b2"], tile_n=tile_gate)[:, :c]

    x_flat = jnp.transpose(x335, (0, 2, 3, 1)).reshape(n * h * w, c)
    y_flat = scale_conv_bn(x_flat, gate, params["w3"],
                           params["gamma"], params["beta"],
                           eps=eps, tile_n=tile_main)[:, :c]
    # TODO(synk): BatchNorm2d running_mean/running_var updates (training-mode
    # side effect) are not reproduced; only the normalized activations are.
    return jnp.transpose(y_flat.reshape(n, h, w, c), (0, 3, 1, 2))


# Pure-JAX reference using the SAME prepared (padded + bf16-rounded) params,
# so the tolerance only has to absorb accumulation-order differences.
def reference_forward(x336, x335, params, eps=1e-5):
    n, c, h, w = x335.shape
    wd = params["w1"].dtype
    xv = x336.reshape(1, c).astype(wd)
    hh = jnp.maximum(
        jnp.dot(xv, params["w1"], preferred_element_type=jnp.float32)
        + params["b1"], 0.0).astype(wd)
    g = jax.nn.sigmoid(
        jnp.dot(hh, params["w2"], preferred_element_type=jnp.float32)
        + params["b2"])[:, :c]
    x_flat = jnp.transpose(x335, (0, 2, 3, 1)).reshape(n * h * w, c)
    xg = (x_flat * g).astype(wd)
    z = jnp.dot(xg, params["w3"][:, :c], preferred_element_type=jnp.float32)
    mean = jnp.mean(z, axis=0, keepdims=True)
    var = jnp.mean((z - mean) ** 2, axis=0, keepdims=True)
    y = ((z - mean) * jax.lax.rsqrt(var + eps) * params["gamma"][:, :c]
         + params["beta"][:, :c])
    return jnp.transpose(y.reshape(n, h, w, c), (0, 3, 1, 2))


if __name__ == "__main__":
    # Small shapes consistent with the module structure (SE block + 1x1 conv
    # + BN); production is N=1, C=2904, Cmid=726, H=W=14 — scaled down here.
    N, C, CMID, H, W = 1, 256, 64, 8, 8

    key = jax.random.PRNGKey(0)
    k1, k2, k3, k4, k5, k6, k7 = jax.random.split(key, 7)

    # Deterministic synthetic parameters (conv weights stored as [Cin, Cout]).
    raw_params = dict(
        w1=0.05 * jax.random.normal(k1, (C, CMID), jnp.float32),
        b1=0.05 * jax.random.normal(k2, (1, CMID), jnp.float32),
        w2=0.05 * jax.random.normal(k3, (CMID, C), jnp.float32),
        b2=0.05 * jax.random.normal(k4, (1, C), jnp.float32),
        w3=0.05 * jax.random.normal(k5, (C, C), jnp.float32),
        gamma=jnp.ones((1, C), jnp.float32),   # BatchNorm2d default affine
        beta=jnp.zeros((1, C), jnp.float32),
    )
    # Pad / cast weights once, outside the per-call hot path.
    params = jax.tree_util.tree_map(
        jax.block_until_ready, prepare_params(raw_params))

    x336 = jax.random.normal(k6, (N, C, 1, 1), jnp.float32)
    x335 = jax.random.normal(k7, (N, C, H, W), jnp.float32)

    fwd = jax.jit(module_forward)
    out = jax.block_until_ready(fwd(x336, x335, params))
    ref = jax.block_until_ready(reference_forward(x336, x335, params))

    assert out.shape == (N, C, H, W)
    assert jnp.allclose(out, ref, atol=2e-3, rtol=2e-3), (
        float(jnp.max(jnp.abs(out - ref))))
    print("KERNEL_OK")
</pallas_src>

<mosaic_0001>
module attributes {stable_mosaic.version = 11 : i64} {
  func.func @_main_kernel(%arg0: i32, %arg1: memref<64x256xf32, #tpu.memory_space<vmem>>, %arg2: memref<1x256xf32, #tpu.memory_space<vmem>>, %arg3: memref<256x512xbf16, #tpu.memory_space<vmem>>, %arg4: memref<1x512xf32, #tpu.memory_space<vmem>>, %arg5: memref<1x512xf32, #tpu.memory_space<vmem>>, %arg6: memref<64x512xf32, #tpu.memory_space<vmem>>) attributes {dimension_semantics = [#tpu.dimension_semantics<parallel>], iteration_bounds = array<i64: 1>, scalar_prefetch = 0 : i64, scratch_operands = 0 : i64, tpu.core_type = #tpu.core_type<tc>, window_params = [{pipeline_mode = #tpu.pipeline_mode<synchronous>, transform_indices = @transform_0, window_bounds = array<i64: 64, 256>}, {pipeline_mode = #tpu.pipeline_mode<synchronous>, transform_indices = @transform_1, window_bounds = array<i64: 1, 256>}, {transform_indices = @transform_2, window_bounds = array<i64: 256, 512>}, {transform_indices = @transform_3, window_bounds = array<i64: 1, 512>}, {transform_indices = @transform_4, window_bounds = array<i64: 1, 512>}, {transform_indices = @transform_5, window_bounds = array<i64: 64, 512>}]} {
    %c0 = arith.constant 0 : index
    %c0_0 = arith.constant 0 : index
    %0 = vector.load %arg1[%c0, %c0_0] : memref<64x256xf32, #tpu.memory_space<vmem>>, vector<64x256xf32>
    %c0_1 = arith.constant 0 : index
    %c0_2 = arith.constant 0 : index
    %1 = vector.load %arg2[%c0_1, %c0_2] : memref<1x256xf32, #tpu.memory_space<vmem>>, vector<1x256xf32>
    %2 = vector.broadcast %1 : vector<1x256xf32> to vector<64x256xf32>
    %3 = arith.mulf %0, %2 : vector<64x256xf32>
    %4 = arith.truncf %3 : vector<64x256xf32> to vector<64x256xbf16>
    %c0_3 = arith.constant 0 : index
    %c0_4 = arith.constant 0 : index
    %5 = vector.load %arg3[%c0_3, %c0_4] : memref<256x512xbf16, #tpu.memory_space<vmem>>, vector<256x512xbf16>
    %cst = arith.constant dense<0.000000e+00> : vector<64x512xf32>
    %6 = tpu.matmul %4, %5, %cst {dimension_numbers = #tpu.dot_dimension_numbers<[1], [0], [0], [1], [0, 0, 1, 1], [], []>} : vector<64x256xbf16>, vector<256x512xbf16>, vector<64x512xf32> -> vector<64x512xf32>
    %cst_5 = arith.constant dense<0.000000e+00> : vector<512xf32>
    %7 = vector.multi_reduction <add>, %6, %cst_5 [0] : vector<64x512xf32> to vector<512xf32>
    %8 = vector.shape_cast %7 : vector<512xf32> to vector<1x512xf32>
    %cst_6 = arith.constant 6.400000e+01 : f32
    %9 = vector.broadcast %cst_6 : f32 to vector<1x512xf32>
    %10 = arith.divf %8, %9 : vector<1x512xf32>
    %11 = vector.broadcast %10 : vector<1x512xf32> to vector<64x512xf32>
    %12 = arith.subf %6, %11 : vector<64x512xf32>
    %13 = arith.mulf %12, %12 : vector<64x512xf32>
    %cst_7 = arith.constant dense<0.000000e+00> : vector<512xf32>
    %14 = vector.multi_reduction <add>, %13, %cst_7 [0] : vector<64x512xf32> to vector<512xf32>
    %15 = vector.shape_cast %14 : vector<512xf32> to vector<1x512xf32>
    %cst_8 = arith.constant 6.400000e+01 : f32
    %16 = vector.broadcast %cst_8 : f32 to vector<1x512xf32>
    %17 = arith.divf %15, %16 : vector<1x512xf32>
    %18 = vector.broadcast %10 : vector<1x512xf32> to vector<64x512xf32>
    %19 = arith.subf %6, %18 : vector<64x512xf32>
    %cst_9 = arith.constant 9.99999974E-6 : f32
    %20 = vector.broadcast %cst_9 : f32 to vector<1x512xf32>
    %21 = arith.addf %17, %20 : vector<1x512xf32>
    %22 = math.rsqrt %21 : vector<1x512xf32>
    %23 = vector.broadcast %22 : vector<1x512xf32> to vector<64x512xf32>
    %24 = arith.mulf %19, %23 : vector<64x512xf32>
    %c0_10 = arith.constant 0 : index
    %c0_11 = arith.constant 0 : index
    %25 = vector.load %arg4[%c0_10, %c0_11] : memref<1x512xf32, #tpu.memory_space<vmem>>, vector<1x512xf32>
    %26 = vector.broadcast %25 : vector<1x512xf32> to vector<64x512xf32>
    %27 = arith.mulf %24, %26 : vector<64x512xf32>
    %c0_12 = arith.constant 0 : index
    %c0_13 = arith.constant 0 : index
    %28 = vector.load %arg5[%c0_12, %c0_13] : memref<1x512xf32, #tpu.memory_space<vmem>>, vector<1x512xf32>
    %29 = vector.broadcast %28 : vector<1x512xf32> to vector<64x512xf32>
    %30 = arith.addf %27, %29 : vector<64x512xf32>
    %c0_14 = arith.constant 0 : index
    %c0_15 = arith.constant 0 : index
    %31 = vector.load %arg6[%c0_14, %c0_15] : memref<64x512xf32, #tpu.memory_space<vmem>>, vector<64x512xf32>
    tpu.vector_store %arg6[%c0_14, %c0_15], %30 {strides = array<i32>} : memref<64x512xf32, #tpu.memory_space<vmem>>, vector<64x512xf32>,
    return
  }
  func.func @transform_0(%arg0: i32) -> (i32, i32) {
    %c0_i32 = arith.constant 0 : i32
    %c0_i32_0 = arith.constant 0 : i32
    %c0_i32_1 = arith.constant 0 : i32
    return %c0_i32, %c0_i32_0 : i32, i32
  }
  func.func @transform_1(%arg0: i32) -> (i32, i32) {
    %c0_i32 = arith.constant 0 : i32
    %c0_i32_0 = arith.constant 0 : i32
    %c0_i32_1 = arith.constant 0 : i32
    return %c0_i32, %c0_i32_0 : i32, i32
  }
  func.func @transform_2(%arg0: i32) -> (i32, i32) {
    %c0_i32 = arith.constant 0 : i32
    %c0_i32_0 = arith.constant 0 : i32
    return %c0_i32, %arg0 : i32, i32
  }
  func.func @transform_3(%arg0: i32) -> (i32, i32) {
    %c0_i32 = arith.constant 0 : i32
    %c0_i32_0 = arith.constant 0 : i32
    return %c0_i32, %arg0 : i32, i32
  }
  func.func @transform_4(%arg0: i32) -> (i32, i32) {
    %c0_i32 = arith.constant 0 : i32
    %c0_i32_0 = arith.constant 0 : i32
    return %c0_i32, %arg0 : i32, i32
  }
  func.func @transform_5(%arg0: i32) -> (i32, i32) {
    %c0_i32 = arith.constant 0 : i32
    %c0_i32_0 = arith.constant 0 : i32
    return %c0_i32, %arg0 : i32, i32
  }
}

module attributes {stable_mosaic.version = 11 : i64} {
  func.func @_gate_kernel(%arg0: i32, %arg1: memref<1x256xf32, #tpu.memory_space<vmem>>, %arg2: memref<256x64xbf16, #tpu.memory_space<vmem>>, %arg3: memref<1x64xf32, #tpu.memory_space<vmem>>, %arg4: memref<64x768xbf16, #tpu.memory_space<vmem>>, %arg5: memref<1x768xf32, #tpu.memory_space<vmem>>, %arg6: memref<1x768xf32, #tpu.memory_space<vmem>>, %arg7: memref<1x64xbf16, #tpu.memory_space<vmem>>) attributes {dimension_semantics = [#tpu.dimension_semantics<arbitrary>], iteration_bounds = array<i64: 1>, scalar_prefetch = 0 : i64, scratch_operands = 1 : i64, tpu.core_type = #tpu.core_type<tc>, window_params = [{pipeline_mode = #tpu.pipeline_mode<synchronous>, transform_indices = @transform_0, window_bounds = array<i64: 1, 256>}, {pipeline_mode = #tpu.pipeline_mode<synchronous>, transform_indices = @transform_1, window_bounds = array<i64: 256, 64>}, {pipeline_mode = #tpu.pipeline_mode<synchronous>, transform_indices = @transform_2, window_bounds = array<i64: 1, 64>}, {transform_indices = @transform_3, window_bounds = array<i64: 64, 768>}, {transform_indices = @transform_4, window_bounds = array<i64: 1, 768>}, {transform_indices = @transform_5, window_bounds = array<i64: 1, 768>}]} {
    %c0_i32 = arith.constant 0 : i32
    %0 = arith.cmpi eq, %arg0, %c0_i32 : i32
    %1 = arith.extui %0 : i1 to i32
    %c0_i32_0 = arith.constant 0 : i32
    %2 = arith.cmpi ne, %1, %c0_i32_0 : i32
    scf.if %2 {
      %c0_9 = arith.constant 0 : index
      %c0_10 = arith.constant 0 : index
      %14 = vector.load %arg1[%c0_9, %c0_10] : memref<1x256xf32, #tpu.memory_space<vmem>>, vector<1x256xf32>
      %15 = arith.truncf %14 : vector<1x256xf32> to vector<1x256xbf16>
      %c0_11 = arith.constant 0 : index
      %c0_12 = arith.constant 0 : index
      %16 = vector.load %arg2[%c0_11, %c0_12] : memref<256x64xbf16, #tpu.memory_space<vmem>>, vector<256x64xbf16>
      %cst_13 = arith.constant dense<0.000000e+00> : vector<1x64xf32>
      %17 = tpu.matmul %15, %16, %cst_13 {dimension_numbers = #tpu.dot_dimension_numbers<[1], [0], [0], [1], [0, 0, 1, 1], [], []>} : vector<1x256xbf16>, vector<256x64xbf16>, vector<1x64xf32> -> vector<1x64xf32>
      %c0_14 = arith.constant 0 : index
      %c0_15 = arith.constant 0 : index
      %18 = vector.load %arg3[%c0_14, %c0_15] : memref<1x64xf32, #tpu.memory_space<vmem>>, vector<1x64xf32>
      %19 = arith.addf %17, %18 : vector<1x64xf32>
      %cst_16 = arith.constant 0.000000e+00 : f32
      %20 = vector.broadcast %cst_16 : f32 to vector<1x64xf32>
      %21 = arith.maximumf %19, %20 : vector<1x64xf32>
      %22 = arith.truncf %21 : vector<1x64xf32> to vector<1x64xbf16>
      %c0_17 = arith.constant 0 : index
      %c0_18 = arith.constant 0 : index
      %23 = vector.load %arg7[%c0_17, %c0_18] : memref<1x64xbf16, #tpu.memory_space<vmem>>, vector<1x64xbf16>
      tpu.vector_store %arg7[%c0_17, %c0_18], %22 {strides = array<i32>} : memref<1x64xbf16, #tpu.memory_space<vmem>>, vector<1x64xbf16>,
    } else {
    }
    %c0 = arith.constant 0 : index
    %c0_1 = arith.constant 0 : index
    %3 = vector.load %arg7[%c0, %c0_1] : memref<1x64xbf16, #tpu.memory_space<vmem>>, vector<1x64xbf16>
    %c0_2 = arith.constant 0 : index
    %c0_3 = arith.constant 0 : index
    %4 = vector.load %arg4[%c0_2, %c0_3] : memref<64x768xbf16, #tpu.memory_space<vmem>>, vector<64x768xbf16>
    %cst = arith.constant dense<0.000000e+00> : vector<1x768xf32>
    %5 = tpu.matmul %3, %4, %cst {dimension_numbers = #tpu.dot_dimension_numbers<[1], [0], [0], [1], [0, 0, 1, 1], [], []>} : vector<1x64xbf16>, vector<64x768xbf16>, vector<1x768xf32> -> vector<1x768xf32>
    %c0_4 = arith.constant 0 : index
    %c0_5 = arith.constant 0 : index
    %6 = vector.load %arg5[%c0_4, %c0_5] : memref<1x768xf32, #tpu.memory_space<vmem>>, vector<1x768xf32>
    %7 = arith.addf %5, %6 : vector<1x768xf32>
    %8 = arith.negf %7 : vector<1x768xf32>
    %9 = math.exp %8 : vector<1x768xf32>
    %cst_6 = arith.constant 1.000000e+00 : f32
    %10 = vector.broadcast %cst_6 : f32 to vector<1x768xf32>
    %11 = arith.addf %10, %9 : vector<1x768xf32>
    %12 = arith.divf %10, %11 : vector<1x768xf32>
    %c0_7 = arith.constant 0 : index
    %c0_8 = arith.constant 0 : index
    %13 = vector.load %arg6[%c0_7, %c0_8] : memref<1x768xf32, #tpu.memory_space<vmem>>, vector<1x768xf32>
    tpu.vector_store %arg6[%c0_7, %c0_8], %12 {strides = array<i32>} : memref<1x768xf32, #tpu.memory_space<vmem>>, vector<1x768xf32>,
    return
  }
  func.func @transform_0(%arg0: i32) -> (i32, i32) {
    %c0_i32 = arith.constant 0 : i32
    %c0_i32_0 = arith.constant 0 : i32
    %c0_i32_1 = arith.constant 0 : i32
    return %c0_i32, %c0_i32_0 : i32, i32
  }
  func.func @transform_1(%arg0: i32) -> (i32, i32) {
    %c0_i32 = arith.constant 0 : i32
    %c0_i32_0 = arith.constant 0 : i32
    %c0_i32_1 = arith.constant 0 : i32
    return %c0_i32, %c0_i32_0 : i32, i32
  }
  func.func @transform_2(%arg0: i32) -> (i32, i32) {
    %c0_i32 = arith.constant 0 : i32
    %c0_i32_0 = arith.constant 0 : i32
    %c0_i32_1 = arith.constant 0 : i32
    return %c0_i32, %c0_i32_0 : i32, i32
  }
  func.func @transform_3(%arg0: i32) -> (i32, i32) {
    %c0_i32 = arith.constant 0 : i32
    %c0_i32_0 = arith.constant 0 : i32
    return %c0_i32, %arg0 : i32, i32
  }
  func.func @transform_4(%arg0: i32) -> (i32, i32) {
    %c0_i32 = arith.constant 0 : i32
    %c0_i32_0 = arith.constant 0 : i32
    return %c0_i32, %arg0 : i32, i32
  }
  func.func @transform_5(%arg0: i32) -> (i32, i32) {
    %c0_i32 = arith.constant 0 : i32
    %c0_i32_0 = arith.constant 0 : i32
    return %c0_i32, %arg0 : i32, i32
  }
}

</mosaic_0001>

<llo_original>
// kernel: module_forward.2
$region0: #{module_forward.2}
  #allocation0 [shape = 'u32[]', space=smem, size = 0x4, offset = 0x4, fixed_abs, tag = 'smem constant byte address 0x4 - core index']
  #allocation1 [shape = 'u32[72,128]{1,0:T(1,128)}', space=vmem, size = 0x9000, scoped, tag = 'internal scratch']
  #allocation2 [shape = 'bf16[1,64]{1,0:T(2,128)(2,1)}', space=vmem, size = 0x200, scoped, tag = 'scratch operand']
  %s0 = inlined_call_operand.vmem [shape: f32[1,256], index: 0, kind: input, shape index: {}]
  %s1 = inlined_call_operand.vmem [shape: bf16[256,64], index: 1, kind: input, shape index: {}]
  %s2 = inlined_call_operand.vmem [shape: f32[1,64], index: 2, kind: input, shape index: {}]
  %s3 = inlined_call_operand.hbm [shape: bf16[64,768], index: 3, kind: input, shape index: {}]
  %s4 = inlined_call_operand.vmem [shape: f32[1,768], index: 4, kind: input, shape index: {}]
  %s5 = inlined_call_operand.vmem [shape: f32[1,768], index: 5, kind: output, shape index: {}]
  %s6 = sld [smem:[#allocation0]]
  $region38: #{module_forward.2} parent=0
    _
  %s8 = ssub.s32 1, %s6
  %s9 = scalar_select 0, %s8, %s6
  $region1: #{module_forward.2} parent=0
    #allocation3 [shape = 'u8[98304]{0}', space=vmem, size = 0x18000, scoped, tag = 'input window, operand 3, single buffered']
    #allocation4 [shape = 's32[1]{0}', space=sflag, size = 0x4, scoped, tag = 'scoped memory for module_forward.2']
    %10 = vsyncpa [#allocation4], 0
    // Predicated region
    $region2: #{module_forward.2} parent=1 // pred_check
      _
    $region3: #{module_forward.2} parent=1 // pred_check_branch
      %12 = sbr.rel (0) target = $region5
    $region4: #{module_forward.2} parent=1 // pred_region
      _
    $region5: #{module_forward.2} parent=1 // pred_fallthru
      _
    // Predicated region
    $region6: #{module_forward.2} parent=1 // pred_check
      _
    $region7: #{module_forward.2} parent=1 // pred_check_branch
      %14 = sbr.rel (0) target = $region9
    $region8: #{module_forward.2} parent=1 // pred_region
      _
    $region9: #{module_forward.2} parent=1 // pred_fallthru
      _
    // Predicated region
    $region10: #{module_forward.2} parent=1 // pred_check
      _
    $region11: #{module_forward.2} parent=1 // pred_check_branch
      %16 = sbr.rel (0) target = $region13
    $region12: #{module_forward.2} parent=1 // pred_region
      _
    $region13: #{module_forward.2} parent=1 // pred_fallthru
      _
    // Predicated region
    $region14: #{module_forward.2} parent=1 // pred_check
      _
    $region15: #{module_forward.2} parent=1 // pred_check_branch
      %18 = sbr.rel (0) target = $region17
    $region16: #{module_forward.2} parent=1 // pred_region
      %20 = vsyncadd [#allocation4], 0
      %s21 = sshll.u32 %s3, 4
      %s22 = int_to_ptr.hbm [resolvable:$true] %s21
      %s23 = sshll.u32 [#allocation3], 4
      %s24 = int_to_ptr.vmem [resolvable:$true] %s23
      %29 = dma.hbm_to_vmem [thread:$0]  %s22, 3072, %s24, [#allocation4], 384, 384, 24
    $region17: #{module_forward.2} parent=1 // pred_fallthru
      _
    // Predicated region
    $region18: #{module_forward.2} parent=1 // pred_check
      _
    $region19: #{module_forward.2} parent=1 // pred_check_branch
      %31 = sbr.rel (0) target = $region21
    $region20: #{module_forward.2} parent=1 // pred_region
      _
    $region21: #{module_forward.2} parent=1 // pred_fallthru
      _
    // Predicated region
    $region22: #{module_forward.2} parent=1 // pred_check
      _
    $region23: #{module_forward.2} parent=1 // pred_check_branch
      %33 = sbr.rel (0) target = $region25
    $region24: #{module_forward.2} parent=1 // pred_region
      %35 = dma.done [#allocation4], 3072
    $region25: #{module_forward.2} parent=1 // pred_fallthru
      _
    %p37 = scmp.eq.s32.totalorder 0, 0
    // Predicated region
    $region26: #{module_forward.2} parent=1 // pred_check
      %p38 = pneg %p37
    $region27: #{module_forward.2} parent=1 // pred_check_branch
      %40 = sbr.rel (%p38) target = $region29
    $region28: #{module_forward.2} parent=1 // pred_region
      %v41 = vld [vmem:[%s0] sm:$0x3]
      %v43 = vperm.slane %v41, 0
      %v44 = vperm.slane %v41, 1
      %v47 = vpack.c.bf16 %v43, %v43
      %v48 = vpack.c.bf16 %v44, %v44
      %v49 = vld [vmem:[%s1] sm:$0xf]
      %v50 = vld [vmem:[%s1 + $0x4] sm:$0xf]
      %v51 = vld [vmem:[%s1 + $0x8] sm:$0xf]
      %v52 = vld [vmem:[%s1 + $0xc] sm:$0xf]
      %v53 = vld [vmem:[%s1 + $0x10] sm:$0xf]
      %v54 = vld [vmem:[%s1 + $0x14] sm:$0xf]
      %v55 = vld [vmem:[%s1 + $0x18] sm:$0xf]
      %v56 = vld [vmem:[%s1 + $0x1c] sm:$0xf]
      %v57 = vld [vmem:[%s1 + $0x20] sm:$0xf]
      %v58 = vld [vmem:[%s1 + $0x24] sm:$0xf]
      %v59 = vld [vmem:[%s1 + $0x28] sm:$0xf]
      %v60 = vld [vmem:[%s1 + $0x2c] sm:$0xf]
      %v61 = vld [vmem:[%s1 + $0x30] sm:$0xf]
      %v62 = vld [vmem:[%s1 + $0x34] sm:$0xf]
      %v63 = vld [vmem:[%s1 + $0x38] sm:$0xf]
      %v64 = vld [vmem:[%s1 + $0x3c] sm:$0xf]
      %v65 = vld [vmem:[%s1 + $0x40] sm:$0xf]
      %v66 = vld [vmem:[%s1 + $0x44] sm:$0xf]
      %v67 = vld [vmem:[%s1 + $0x48] sm:$0xf]
      %v68 = vld [vmem:[%s1 + $0x4c] sm:$0xf]
      %v69 = vld [vmem:[%s1 + $0x50] sm:$0xf]
      %v70 = vld [vmem:[%s1 + $0x54] sm:$0xf]
      %v71 = vld [vmem:[%s1 + $0x58] sm:$0xf]
      %v72 = vld [vmem:[%s1 + $0x5c] sm:$0xf]
      %v73 = vld [vmem:[%s1 + $0x60] sm:$0xf]
      %v74 = vld [vmem:[%s1 + $0x64] sm:$0xf]
      %v75 = vld [vmem:[%s1 + $0x68] sm:$0xf]
      %v76 = vld [vmem:[%s1 + $0x6c] sm:$0xf]
      %v77 = vld [vmem:[%s1 + $0x70] sm:$0xf]
      %v78 = vld [vmem:[%s1 + $0x74] sm:$0xf]
      %v79 = vld [vmem:[%s1 + $0x78] sm:$0xf]
      %v80 = vld [vmem:[%s1 + $0x7c] sm:$0xf]
      %v81 = vld [vmem:[%s2] sm:$0x1]
      %v114 = vunpack.c.l.b16 %v49
      %v115 = vunpack.c.l.b16 %v50
      %v116 = vunpack.c.l.b16 %v51
      %v117 = vunpack.c.l.b16 %v52
      %v118 = vunpack.c.l.b16 %v53
      %v119 = vunpack.c.l.b16 %v54
      %v120 = vunpack.c.l.b16 %v55
      %v121 = vunpack.c.l.b16 %v56
      %v122 = vunpack.c.l.b16 %v57
      %v123 = vunpack.c.l.b16 %v58
      %v124 = vunpack.c.l.b16 %v59
      %v125 = vunpack.c.l.b16 %v60
      %v126 = vunpack.c.l.b16 %v61
      %v127 = vunpack.c.l.b16 %v62
      %v128 = vunpack.c.l.b16 %v63
      %v129 = vunpack.c.l.b16 %v64
      %v130 = vunpack.c.l.b16 %v65
      %v131 = vunpack.c.l.b16 %v66
      %v132 = vunpack.c.l.b16 %v67
      %v133 = vunpack.c.l.b16 %v68
      %v134 = vunpack.c.l.b16 %v69
      %v135 = vunpack.c.l.b16 %v70
      %v136 = vunpack.c.l.b16 %v71
      %v137 = vunpack.c.l.b16 %v72
      %v138 = vunpack.c.l.b16 %v73
      %v139 = vunpack.c.l.b16 %v74
      %v140 = vunpack.c.l.b16 %v75
      %v141 = vunpack.c.l.b16 %v76
      %v142 = vunpack.c.l.b16 %v77
      %v143 = vunpack.c.l.b16 %v78
      %v144 = vunpack.c.l.b16 %v79
      %v145 = vunpack.c.l.b16 %v80
      %v146 = vpack.c.b16 %v115, %v114
      %v147 = vpack.c.b16 %v117, %v116
      %v148 = vpack.c.b16 %v119, %v118
      %v149 = vpack.c.b16 %v121, %v120
      %v150 = vpack.c.b16 %v123, %v122
      %v151 = vpack.c.b16 %v125, %v124
      %v152 = vpack.c.b16 %v127, %v126
      %v153 = vpack.c.b16 %v129, %v128
      %v154 = vpack.c.b16 %v131, %v130
      %v155 = vpack.c.b16 %v133, %v132
      %v156 = vpack.c.b16 %v135, %v134
      %v157 = vpack.c.b16 %v137, %v136
      %v158 = vpack.c.b16 %v139, %v138
      %v159 = vpack.c.b16 %v141, %v140
      %v160 = vpack.c.b16 %v143, %v142
      %v161 = vpack.c.b16 %v145, %v144
      %178 = vmatpush.bf16.msra.mxu0 %v153
      %179 = vmatpush.bf16.msra.mxu0 %v152
      %180 = vmatpush.bf16.msra.mxu0 %v151
      %181 = vmatpush.bf16.msra.mxu0 %v150
      %182 = vmatpush.bf16.msra.mxu0 %v149
      %183 = vmatpush.bf16.msra.mxu0 %v148
      %184 = vmatpush.bf16.msra.mxu0 %v147
      %185 = vmatpush.bf16.msra.mxu0 %v146
      %186 = vmatmul.bf16.gmra.mxu0 %v47
      %v187 = vpop.f32.mrf.mxu0
      %v188 = vadd.f32 %v81, %v187
      %v189 = vpop.f32.mrf.mxu0
      %190 = vdwg.mxu0
      %191 = vmatpush.bf16.msra.mxu0 %v161
      %192 = vmatpush.bf16.msra.mxu0 %v160
      %193 = vmatpush.bf16.msra.mxu0 %v159
      %194 = vmatpush.bf16.msra.mxu0 %v158
      %195 = vmatpush.bf16.msra.mxu0 %v157
      %196 = vmatpush.bf16.msra.mxu0 %v156
      %197 = vmatpush.bf16.msra.mxu0 %v155
      %198 = vmatpush.bf16.msra.mxu0 %v154
      %199 = vmatmul.bf16.gmra.mxu0 %v48
      %v200 = vpop.f32.mrf.mxu0
      %v201 = vadd.f32 %v188, %v200
      %v202 = vpop.f32.mrf.mxu0
      %203 = vdwg.mxu0
      %v204 = vmax.f32 %v201, 0.0
      %v205 = vpack.c.bf16 %v204, %v204
      %vm206 = vcmask 516096
      %vm207 = vsmask.f32 256
      %vm208 = vmand %vm206, %vm207
      %v209 = vld [vmem:[#allocation2] sm:$0x1]
      %v210 = vsel %vm208, %v205, %v209
      %211 = vst [vmem:[#allocation2] sm:$0x1] %v210
    $region29: #{module_forward.2} parent=1 // pred_fallthru
      _
    %v212 = vld [vmem:[#allocation2] sm:$0x1]
    %v213 = vld [vmem:[#allocation3] sm:$0xff]
    %v214 = vld [vmem:[#allocation3 + $0x8] sm:$0xff]
    %v215 = vld [vmem:[#allocation3 + $0x10] sm:$0xff]
    %v216 = vld [vmem:[#allocation3 + $0x18] sm:$0xff]
    %v217 = vld [vmem:[#allocation3 + $0x20] sm:$0xff]
    %v218 = vld [vmem:[#allocation3 + $0x28] sm:$0xff]
    %v219 = vld [vmem:[#allocation3 + $0x30] sm:$0xff]
    %v220 = vld [vmem:[#allocation3 + $0x38] sm:$0xff]
    %v221 = vld [vmem:[#allocation3 + $0x40] sm:$0xff]
    %v222 = vld [vmem:[#allocation3 + $0x48] sm:$0xff]
    %v223 = vld [vmem:[#allocation3 + $0x50] sm:$0xff]
    %v224 = vld [vmem:[#allocation3 + $0x58] sm:$0xff]
    %v225 = vld [vmem:[#allocation3 + $0x60] sm:$0xff]
    %v226 = vld [vmem:[#allocation3 + $0x68] sm:$0xff]
    %v227 = vld [vmem:[#allocation3 + $0x70] sm:$0xff]
    %v228 = vld [vmem:[#allocation3 + $0x78] sm:$0xff]
    %v229 = vld [vmem:[#allocation3 + $0x80] sm:$0xff]
    %v230 = vld [vmem:[#allocation3 + $0x88] sm:$0xff]
    %v231 = vld [vmem:[#allocation3 + $0x90] sm:$0xff]
    %v232 = vld [vmem:[#allocation3 + $0x98] sm:$0xff]
    %v233 = vld [vmem:[#allocation3 + $0xa0] sm:$0xff]
    %v234 = vld [vmem:[#allocation3 + $0xa8] sm:$0xff]
    %v235 = vld [vmem:[#allocation3 + $0xb0] sm:$0xff]
    %v236 = vld [vmem:[#allocation3 + $0xb8] sm:$0xff]
    %v237 = vld [vmem:[%s4] sm:$0x3f]
    %v262 = vunpack.c.l.b16 %v213
    %v263 = vunpack.c.h.b16 %v213
    %v264 = vunpack.c.l.b16 %v214
    %v265 = vunpack.c.h.b16 %v214
    %v266 = vunpack.c.l.b16 %v215
    %v267 = vunpack.c.h.b16 %v215
    %v268 = vunpack.c.l.b16 %v216
    %v269 = vunpack.c.h.b16 %v216
    %v270 = vunpack.c.l.b16 %v217
    %v271 = vunpack.c.h.b16 %v217
    %v272 = vunpack.c.l.b16 %v218
    %v273 = vunpack.c.h.b16 %v218
    %v274 = vunpack.c.l.b16 %v219
    %v275 = vunpack.c.h.b16 %v219
    %v276 = vunpack.c.l.b16 %v220
    %v277 = vunpack.c.h.b16 %v220
    %v278 = vunpack.c.l.b16 %v221
    %v279 = vunpack.c.h.b16 %v221
    %v280 = vunpack.c.l.b16 %v222
    %v281 = vunpack.c.h.b16 %v222
    %v282 = vunpack.c.l.b16 %v223
    %v283 = vunpack.c.h.b16 %v223
    %v284 = vunpack.c.l.b16 %v224
    %v285 = vunpack.c.h.b16 %v224
    %v286 = vunpack.c.l.b16 %v225
    %v287 = vunpack.c.h.b16 %v225
    %v288 = vunpack.c.l.b16 %v226
    %v289 = vunpack.c.h.b16 %v226
    %v290 = vunpack.c.l.b16 %v227
    %v291 = vunpack.c.h.b16 %v227
    %v292 = vunpack.c.l.b16 %v228
    %v293 = vunpack.c.h.b16 %v228
    %v294 = vunpack.c.l.b16 %v229
    %v295 = vunpack.c.h.b16 %v229
    %v296 = vunpack.c.l.b16 %v230
    %v297 = vunpack.c.h.b16 %v230
    %v298 = vunpack.c.l.b16 %v231
    %v299 = vunpack.c.h.b16 %v231
    %v300 = vunpack.c.l.b16 %v232
    %v301 = vunpack.c.h.b16 %v232
    %v302 = vunpack.c.l.b16 %v233
    %v303 = vunpack.c.h.b16 %v233
    %v304 = vunpack.c.l.b16 %v234
    %v305 = vunpack.c.h.b16 %v234
    %v306 = vunpack.c.l.b16 %v235
    %v307 = vunpack.c.h.b16 %v235
    %v308 = vunpack.c.l.b16 %v236
    %v309 = vunpack.c.h.b16 %v236
    %v310 = vpack.c.b16 %v268, %v262
    %v311 = vpack.c.b16 %v269, %v263
    %v312 = vpack.c.b16 %v270, %v264
    %v313 = vpack.c.b16 %v271, %v265
    %v314 = vpack.c.b16 %v272, %v266
    %v315 = vpack.c.b16 %v273, %v267
    %v316 = vpack.c.b16 %v280, %v274
    %v317 = vpack.c.b16 %v281, %v275
    %v318 = vpack.c.b16 %v282, %v276
    %v319 = vpack.c.b16 %v283, %v277
    %v320 = vpack.c.b16 %v284, %v278
    %v321 = vpack.c.b16 %v285, %v279
    %v322 = vpack.c.b16 %v292, %v286
    %v323 = vpack.c.b16 %v293, %v287
    %v324 = vpack.c.b16 %v294, %v288
    %v325 = vpack.c.b16 %v295, %v289
    %v326 = vpack.c.b16 %v296, %v290
    %v327 = vpack.c.b16 %v297, %v291
    %v328 = vpack.c.b16 %v304, %v298
    %v329 = vpack.c.b16 %v305, %v299
    %v330 = vpack.c.b16 %v306, %v300
    %v331 = vpack.c.b16 %v307, %v301
    %v332 = vpack.c.b16 %v308, %v302
    %v333 = vpack.c.b16 %v309, %v303
    %v359 = vperm.slane %v237, 0
    %v360 = vperm.slane %v237, 1
    %v361 = vperm.slane %v237, 2
    %v362 = vperm.slane %v237, 3
    %v363 = vperm.slane %v237, 4
    %v364 = vperm.slane %v237, 5
    %vm371 = vcmask 523264
    %v373 = vsel %vm371, %v212, 0
    %375 = vmatpush.bf16.msra.mxu0 0
    %376 = vmatpush.bf16.msra.mxu0 0
    %377 = vmatpush.bf16.msra.mxu0 0
    %378 = vmatpush.bf16.msra.mxu0 0
    %379 = vmatpush.bf16.msra.mxu0 %v328
    %380 = vmatpush.bf16.msra.mxu0 %v322
    %381 = vmatpush.bf16.msra.mxu0 %v316
    %382 = vmatpush.bf16.msra.mxu0 %v310
    %383 = vmatmul.bf16.gmra.mxu0 %v373
    %v384 = vpop.f32.mrf.mxu0
    %v385 = vadd.f32 %v359, %v384
    %v386 = vpop.f32.mrf.mxu0
    %387 = vdwg.mxu0
    %388 = vmatpush.bf16.msra.mxu0 0
    %389 = vmatpush.bf16.msra.mxu0 0
    %390 = vmatpush.bf16.msra.mxu0 0
    %391 = vmatpush.bf16.msra.mxu0 0
    %392 = vmatpush.bf16.msra.mxu0 %v329
    %393 = vmatpush.bf16.msra.mxu0 %v323
    %394 = vmatpush.bf16.msra.mxu0 %v317
    %395 = vmatpush.bf16.msra.mxu0 %v311
    %396 = vmatmul.bf16.gmra.mxu0 %v373
    %v397 = vpop.f32.mrf.mxu0
    %v398 = vadd.f32 %v360, %v397
    %v399 = vpop.f32.mrf.mxu0
    %400 = vdwg.mxu0
    %401 = vmatpush.bf16.msra.mxu0 0
    %402 = vmatpush.bf16.msra.mxu0 0
    %403 = vmatpush.bf16.msra.mxu0 0
    %404 = vmatpush.bf16.msra.mxu0 0
    %405 = vmatpush.bf16.msra.mxu0 %v330
    %406 = vmatpush.bf16.msra.mxu0 %v324
    %407 = vmatpush.bf16.msra.mxu0 %v318
    %408 = vmatpush.bf16.msra.mxu0 %v312
    %409 = vmatmul.bf16.gmra.mxu0 %v373
    %v410 = vpop.f32.mrf.mxu0
    %v411 = vadd.f32 %v361, %v410
    %v412 = vpop.f32.mrf.mxu0
    %413 = vdwg.mxu0
    %414 = vmatpush.bf16.msra.mxu0 0
    %415 = vmatpush.bf16.msra.mxu0 0
    %416 = vmatpush.bf16.msra.mxu0 0
    %417 = vmatpush.bf16.msra.mxu0 0
    %418 = vmatpush.bf16.msra.mxu0 %v331
    %419 = vmatpush.bf16.msra.mxu0 %v325
    %420 = vmatpush.bf16.msra.mxu0 %v319
    %421 = vmatpush.bf16.msra.mxu0 %v313
    %422 = vmatmul.bf16.gmra.mxu0 %v373
    %v423 = vpop.f32.mrf.mxu0
    %v424 = vadd.f32 %v362, %v423
    %v425 = vpop.f32.mrf.mxu0
    %426 = vdwg.mxu0
    %427 = vmatpush.bf16.msra.mxu0 0
    %428 = vmatpush.bf16.msra.mxu0 0
    %429 = vmatpush.bf16.msra.mxu0 0
    %430 = vmatpush.bf16.msra.mxu0 0
    %431 = vmatpush.bf16.msra.mxu0 %v332
    %432 = vmatpush.bf16.msra.mxu0 %v326
    %433 = vmatpush.bf16.msra.mxu0 %v320
    %434 = vmatpush.bf16.msra.mxu0 %v314
    %435 = vmatmul.bf16.gmra.mxu0 %v373
    %v436 = vpop.f32.mrf.mxu0
    %v437 = vadd.f32 %v363, %v436
    %v438 = vpop.f32.mrf.mxu0
    %439 = vdwg.mxu0
    %440 = vmatpush.bf16.msra.mxu0 0
    %441 = vmatpush.bf16.msra.mxu0 0
    %442 = vmatpush.bf16.msra.mxu0 0
    %443 = vmatpush.bf16.msra.mxu0 0
    %444 = vmatpush.bf16.msra.mxu0 %v333
    %445 = vmatpush.bf16.msra.mxu0 %v327
    %446 = vmatpush.bf16.msra.mxu0 %v321
    %447 = vmatpush.bf16.msra.mxu0 %v315
    %448 = vmatmul.bf16.gmra.mxu0 %v373
    %v449 = vpop.f32.mrf.mxu0
    %v450 = vadd.f32 %v364, %v449
    %v451 = vpop.f32.mrf.mxu0
    %452 = vdwg.mxu0
    %v453 = vxor.u32 %v385, 2147483648
    %v454 = vxor.u32 %v398, 2147483648
    %v455 = vxor.u32 %v411, 2147483648
    %v456 = vxor.u32 %v424, 2147483648
    %v457 = vxor.u32 %v437, 2147483648
    %v458 = vxor.u32 %v450, 2147483648
    %v459 = vmul.f32 %v453, 1.442695
    %v460 = vpow.pop %v459
    %v461 = vmul.f32 %v454, 1.442695
    %v462 = vpow.pop %v461
    %v463 = vmul.f32 %v455, 1.442695
    %v464 = vpow.pop %v463
    %v465 = vmul.f32 %v456, 1.442695
    %v466 = vpow.pop %v465
    %v467 = vmul.f32 %v457, 1.442695
    %v468 = vpow.pop %v467
    %v469 = vmul.f32 %v458, 1.442695
    %v470 = vpow.pop %v469
    %v471 = vadd.f32 %v460, 1.0
    %v472 = vadd.f32 %v462, 1.0
    %v473 = vadd.f32 %v464, 1.0
    %v474 = vadd.f32 %v466, 1.0
    %v475 = vadd.f32 %v468, 1.0
    %v476 = vadd.f32 %v470, 1.0
    %v477 = vrcp.pop %v471
    %v478 = vmul.f32 %v471, %v477
    %v479 = vsub.f32 1.0, %v478
    %v480 = vmul.f32 %v477, %v479
    %v481 = vadd.f32 %v477, %v480
    %vm482 = vweird.f32 %v471
    %vm483 = vweird.f32 %v477
    %vm484 = vmor %vm482, %vm483
    %v485 = vsel %vm484, %v477, %v481
    %v486 = vand.u32 2147483647, %v471
    %vm487 = vcmp.eq.f32.partialorder %v486, 8.507059e+37
    %v488 = vand.u32 %v471, 2147483648
    %v489 = vor.u32 1.1754944e-38, %v488
    %v490 = vsel %vm487, %v489, %v485
    %v491 = vmul.f32 1.0, %v490
    %v492 = vrcp.pop %v472
    %v493 = vmul.f32 %v472, %v492
    %v494 = vsub.f32 1.0, %v493
    %v495 = vmul.f32 %v492, %v494
    %v496 = vadd.f32 %v492, %v495
    %vm497 = vweird.f32 %v472
    %vm498 = vweird.f32 %v492
    %vm499 = vmor %vm497, %vm498
    %v500 = vsel %vm499, %v492, %v496
    %v501 = vand.u32 2147483647, %v472
    %vm502 = vcmp.eq.f32.partialorder %v501, 8.507059e+37
    %v503 = vand.u32 %v472, 2147483648
    %v504 = vor.u32 1.1754944e-38, %v503
    %v505 = vsel %vm502, %v504, %v500
    %v506 = vmul.f32 1.0, %v505
    %v507 = vrcp.pop %v473
    %v508 = vmul.f32 %v473, %v507
    %v509 = vsub.f32 1.0, %v508
    %v510 = vmul.f32 %v507, %v509
    %v511 = vadd.f32 %v507, %v510
    %vm512 = vweird.f32 %v473
    %vm513 = vweird.f32 %v507
    %vm514 = vmor %vm512, %vm513
    %v515 = vsel %vm514, %v507, %v511
    %v516 = vand.u32 2147483647, %v473
    %vm517 = vcmp.eq.f32.partialorder %v516, 8.507059e+37
    %v518 = vand.u32 %v473, 2147483648
    %v519 = vor.u32 1.1754944e-38, %v518
    %v520 = vsel %vm517, %v519, %v515
    %v521 = vmul.f32 1.0, %v520
    %v522 = vrcp.pop %v474
    %v523 = vmul.f32 %v474, %v522
    %v524 = vsub.f32 1.0, %v523
    %v525 = vmul.f32 %v522, %v524
    %v526 = vadd.f32 %v522, %v525
    %vm527 = vweird.f32 %v474
    %vm528 = vweird.f32 %v522
    %vm529 = vmor %vm527, %vm528
    %v530 = vsel %vm529, %v522, %v526
    %v531 = vand.u32 2147483647, %v474
    %vm532 = vcmp.eq.f32.partialorder %v531, 8.507059e+37
    %v533 = vand.u32 %v474, 2147483648
    %v534 = vor.u32 1.1754944e-38, %v533
    %v535 = vsel %vm532, %v534, %v530
    %v536 = vmul.f32 1.0, %v535
    %v537 = vrcp.pop %v475
    %v538 = vmul.f32 %v475, %v537
    %v539 = vsub.f32 1.0, %v538
    %v540 = vmul.f32 %v537, %v539
    %v541 = vadd.f32 %v537, %v540
    %vm542 = vweird.f32 %v475
    %vm543 = vweird.f32 %v537
    %vm544 = vmor %vm542, %vm543
    %v545 = vsel %vm544, %v537, %v541
    %v546 = vand.u32 2147483647, %v475
    %vm547 = vcmp.eq.f32.partialorder %v546, 8.507059e+37
    %v548 = vand.u32 %v475, 2147483648
    %v549 = vor.u32 1.1754944e-38, %v548
    %v550 = vsel %vm547, %v549, %v545
    %v551 = vmul.f32 1.0, %v550
    %v552 = vrcp.pop %v476
    %v553 = vmul.f32 %v476, %v552
    %v554 = vsub.f32 1.0, %v553
    %v555 = vmul.f32 %v552, %v554
    %v556 = vadd.f32 %v552, %v555
    %vm557 = vweird.f32 %v476
    %vm558 = vweird.f32 %v552
    %vm559 = vmor %vm557, %vm558
    %v560 = vsel %vm559, %v552, %v556
    %v561 = vand.u32 2147483647, %v476
    %vm562 = vcmp.eq.f32.partialorder %v561, 8.507059e+37
    %v563 = vand.u32 %v476, 2147483648
    %v564 = vor.u32 1.1754944e-38, %v563
    %v565 = vsel %vm562, %v564, %v560
    %v566 = vmul.f32 1.0, %v565
    %v573 = vrot.slane %v506, 7
    %v574 = vrot.slane %v521, 6
    %v575 = vrot.slane %v536, 5
    %v576 = vrot.slane %v551, 4
    %v577 = vrot.slane %v566, 3
    %vm578 = vcmask 1040384
    %v579 = vsel %vm578, %v491, %v573
    %vm580 = vcmask 1041408
    %v581 = vsel %vm580, %v579, %v574
    %vm582 = vcmask 1043459
    %v583 = vsel %vm582, %v575, %v576
    %vm584 = vcmask 1044483
    %v585 = vsel %vm584, %v583, %v577
    %vm586 = vcmask 1042432
    %v587 = vsel %vm586, %v581, %v585
    %v589 = vlaneseq
    %vm590 = vcmp.ge.s32.totalorder %v589, 0
    %vm591 = vcmp.lt.s32.totalorder %v589, 768
    %vm592 = vmand %vm590, %vm591
    %593 = vst.msk [vmem:[%s5] sm:$0x3f] %vm592, %v587
    // Predicated region
    $region30: #{module_forward.2} parent=1 // pred_check
      _
    $region31: #{module_forward.2} parent=1 // pred_check_branch
      %595 = sbr.rel (0) target = $region33
    $region32: #{module_forward.2} parent=1 // pred_region
      _
    $region33: #{module_forward.2} parent=1 // pred_fallthru
      _
    // Predicated region
    $region34: #{module_forward.2} parent=1 // pred_check
      _
    $region35: #{module_forward.2} parent=1 // pred_check_branch
      %597 = sbr.rel (0) target = $region37
    $region36: #{module_forward.2} parent=1 // pred_region
      _
    $region37: #{module_forward.2} parent=1 // pred_fallthru
      _
    %598 = vsyncpa [#allocation4], 1

// kernel: module_forward.3
$region0: #{module_forward.3}
  #allocation0 [shape = 'u32[]', space=smem, size = 0x4, offset = 0x4, fixed_abs, tag = 'smem constant byte address 0x4 - core index']
  #allocation1 [shape = 'u32[72,128]{1,0:T(1,128)}', space=vmem, size = 0x9000, scoped, tag = 'internal scratch']
  %s0 = inlined_call_operand.vmem [shape: f32[64,256], index: 0, kind: input, shape index: {}]
  %s1 = inlined_call_operand.vmem [shape: f32[1,256], index: 1, kind: input, shape index: {}]
  %s2 = inlined_call_operand.hbm [shape: bf16[256,512], index: 2, kind: input, shape index: {}]
  %s3 = inlined_call_operand.vmem [shape: f32[1,512], index: 3, kind: input, shape index: {}]
  %s4 = inlined_call_operand.vmem [shape: f32[1,512], index: 4, kind: input, shape index: {}]
  %s5 = inlined_call_operand.vmem [shape: f32[64,512], index: 5, kind: output, shape index: {}]
  %s6 = sld [smem:[#allocation0]]
  $region34: #{module_forward.3} parent=0
    _
  %s8 = ssub.s32 1, %s6
  %s9 = scalar_select 0, %s8, %s6
  $region1: #{module_forward.3} parent=0
    #allocation2 [shape = 'u8[262144]{0}', space=vmem, size = 0x40000, scoped, tag = 'input window, operand 2, single buffered']
    #allocation3 [shape = 's32[1]{0}', space=sflag, size = 0x4, scoped, tag = 'scoped memory for module_forward.3']
    %10 = vsyncpa [#allocation3], 0
    // Predicated region
    $region2: #{module_forward.3} parent=1 // pred_check
      _
    $region3: #{module_forward.3} parent=1 // pred_check_branch
      %12 = sbr.rel (0) target = $region5
    $region4: #{module_forward.3} parent=1 // pred_region
      _
    $region5: #{module_forward.3} parent=1 // pred_fallthru
      _
    // Predicated region
    $region6: #{module_forward.3} parent=1 // pred_check
      _
    $region7: #{module_forward.3} parent=1 // pred_check_branch
      %14 = sbr.rel (0) target = $region9
    $region8: #{module_forward.3} parent=1 // pred_region
      _
    $region9: #{module_forward.3} parent=1 // pred_fallthru
      _
    // Predicated region
    $region10: #{module_forward.3} parent=1 // pred_check
      _
    $region11: #{module_forward.3} parent=1 // pred_check_branch
      %16 = sbr.rel (0) target = $region13
    $region12: #{module_forward.3} parent=1 // pred_region
      %18 = vsyncadd [#allocation3], 0
      %s19 = sshll.u32 %s2, 4
      %s20 = int_to_ptr.hbm [resolvable:$true] %s19
      %s21 = sshll.u32 [#allocation2], 4
      %s22 = int_to_ptr.vmem [resolvable:$true] %s21
      %27 = dma.hbm_to_vmem [thread:$0]  %s20, 8192, %s22, [#allocation3], 256, 256, 16
    $region13: #{module_forward.3} parent=1 // pred_fallthru
      _
    // Predicated region
    $region14: #{module_forward.3} parent=1 // pred_check
      _
    $region15: #{module_forward.3} parent=1 // pred_check_branch
      %29 = sbr.rel (0) target = $region17
    $region16: #{module_forward.3} parent=1 // pred_region
      _
    $region17: #{module_forward.3} parent=1 // pred_fallthru
      _
    // Predicated region
    $region18: #{module_forward.3} parent=1 // pred_check
      _
    $region19: #{module_forward.3} parent=1 // pred_check_branch
      %31 = sbr.rel (0) target = $region21
    $region20: #{module_forward.3} parent=1 // pred_region
      _
    $region21: #{module_forward.3} parent=1 // pred_fallthru
      _
    // Predicated region
    $region22: #{module_forward.3} parent=1 // pred_check
      _
    $region23: #{module_forward.3} parent=1 // pred_check_branch
      %33 = sbr.rel (0) target = $region25
    $region24: #{module_forward.3} parent=1 // pred_region
      %35 = dma.done [#allocation3], 8192
    $region25: #{module_forward.3} parent=1 // pred_fallthru
      _
    %v36 = vld [vmem:[%s0] sm:$0xff]
    %v37 = vld [vmem:[%s0 + $0x8] sm:$0xff]
    %v38 = vld [vmem:[%s0 + $0x10] sm:$0xff]
    %v39 = vld [vmem:[%s0 + $0x18] sm:$0xff]
    %v40 = vld [vmem:[%s0 + $0x20] sm:$0xff]
    %v41 = vld [vmem:[%s0 + $0x28] sm:$0xff]
    %v42 = vld [vmem:[%s0 + $0x30] sm:$0xff]
    %v43 = vld [vmem:[%s0 + $0x38] sm:$0xff]
    %v44 = vld [vmem:[%s0 + $0x40] sm:$0xff]
    %v45 = vld [vmem:[%s0 + $0x48] sm:$0xff]
    %v46 = vld [vmem:[%s0 + $0x50] sm:$0xff]
    %v47 = vld [vmem:[%s0 + $0x58] sm:$0xff]
    %v48 = vld [vmem:[%s0 + $0x60] sm:$0xff]
    %v49 = vld [vmem:[%s0 + $0x68] sm:$0xff]
    %v50 = vld [vmem:[%s0 + $0x70] sm:$0xff]
    %v51 = vld [vmem:[%s0 + $0x78] sm:$0xff]
    %v52 = vld [vmem:[%s1] sm:$0x3]
    %v54 = vperm.slane %v52, 0
    %v55 = vperm.slane %v52, 1
    %v58 = vmul.f32 %v36, %v54
    %v59 = vmul.f32 %v37, %v55
    %v60 = vmul.f32 %v38, %v54
    %v61 = vmul.f32 %v39, %v55
    %v62 = vmul.f32 %v40, %v54
    %v63 = vmul.f32 %v41, %v55
    %v64 = vmul.f32 %v42, %v54
    %v65 = vmul.f32 %v43, %v55
    %v66 = vmul.f32 %v44, %v54
    %v67 = vmul.f32 %v45, %v55
    %v68 = vmul.f32 %v46, %v54
    %v69 = vmul.f32 %v47, %v55
    %v70 = vmul.f32 %v48, %v54
    %v71 = vmul.f32 %v49, %v55
    %v72 = vmul.f32 %v50, %v54
    %v73 = vmul.f32 %v51, %v55
    %v74 = vpack.c.bf16 %v60, %v58
    %v75 = vpack.c.bf16 %v61, %v59
    %v76 = vpack.c.bf16 %v64, %v62
    %v77 = vpack.c.bf16 %v65, %v63
    %v78 = vpack.c.bf16 %v68, %v66
    %v79 = vpack.c.bf16 %v69, %v67
    %v80 = vpack.c.bf16 %v72, %v70
    %v81 = vpack.c.bf16 %v73, %v71
    %v82 = vld [vmem:[#allocation2] sm:$0xff]
    %v83 = vld [vmem:[#allocation2 + $0x8] sm:$0xff]
    %v84 = vld [vmem:[#allocation2 + $0x10] sm:$0xff]
    %v85 = vld [vmem:[#allocation2 + $0x18] sm:$0xff]
    %v86 = vld [vmem:[#allocation2 + $0x20] sm:$0xff]
    %v87 = vld [vmem:[#allocation2 + $0x28] sm:$0xff]
    %v88 = vld [vmem:[#allocation2 + $0x30] sm:$0xff]
    %v89 = vld [vmem:[#allocation2 + $0x38] sm:$0xff]
    %v90 = vld [vmem:[#allocation2 + $0x40] sm:$0xff]
    %v91 = vld [vmem:[#allocation2 + $0x48] sm:$0xff]
    %v92 = vld [vmem:[#allocation2 + $0x50] sm:$0xff]
    %v93 = vld [vmem:[#allocation2 + $0x58] sm:$0xff]
    %v94 = vld [vmem:[#allocation2 + $0x60] sm:$0xff]
    %v95 = vld [vmem:[#allocation2 + $0x68] sm:$0xff]
    %v96 = vld [vmem:[#allocation2 + $0x70] sm:$0xff]
    %v97 = vld [vmem:[#allocation2 + $0x78] sm:$0xff]
    %v98 = vld [vmem:[#allocation2 + $0x80] sm:$0xff]
    %v99 = vld [vmem:[#allocation2 + $0x88] sm:$0xff]
    %v100 = vld [vmem:[#allocation2 + $0x90] sm:$0xff]
    %v101 = vld [vmem:[#allocation2 + $0x98] sm:$0xff]
    %v102 = vld [vmem:[#allocation2 + $0xa0] sm:$0xff]
    %v103 = vld [vmem:[#allocation2 + $0xa8] sm:$0xff]
    %v104 = vld [vmem:[#allocation2 + $0xb0] sm:$0xff]
    %v105 = vld [vmem:[#allocation2 + $0xb8] sm:$0xff]
    %v106 = vld [vmem:[#allocation2 + $0xc0] sm:$0xff]
    %v107 = vld [vmem:[#allocation2 + $0xc8] sm:$0xff]
    %v108 = vld [vmem:[#allocation2 + $0xd0] sm:$0xff]
    %v109 = vld [vmem:[#allocation2 + $0xd8] sm:$0xff]
    %v110 = vld [vmem:[#allocation2 + $0xe0] sm:$0xff]
    %v111 = vld [vmem:[#allocation2 + $0xe8] sm:$0xff]
    %v112 = vld [vmem:[#allocation2 + $0xf0] sm:$0xff]
    %v113 = vld [vmem:[#allocation2 + $0xf8] sm:$0xff]
    %v114 = vld [vmem:[#allocation2 + $0x100] sm:$0xff]
    %v115 = vld [vmem:[#allocation2 + $0x108] sm:$0xff]
    %v116 = vld [vmem:[#allocation2 + $0x110] sm:$0xff]
    %v117 = vld [vmem:[#allocation2 + $0x118] sm:$0xff]
    %v118 = vld [vmem:[#allocation2 + $0x120] sm:$0xff]
    %v119 = vld [vmem:[#allocation2 + $0x128] sm:$0xff]
    %v120 = vld [vmem:[#allocation2 + $0x130] sm:$0xff]
    %v121 = vld [vmem:[#allocation2 + $0x138] sm:$0xff]
    %v122 = vld [vmem:[#allocation2 + $0x140] sm:$0xff]
    %v123 = vld [vmem:[#allocation2 + $0x148] sm:$0xff]
    %v124 = vld [vmem:[#allocation2 + $0x150] sm:$0xff]
    %v125 = vld [vmem:[#allocation2 + $0x158] sm:$0xff]
    %v126 = vld [vmem:[#allocation2 + $0x160] sm:$0xff]
    %v127 = vld [vmem:[#allocation2 + $0x168] sm:$0xff]
    %v128 = vld [vmem:[#allocation2 + $0x170] sm:$0xff]
    %v129 = vld [vmem:[#allocation2 + $0x178] sm:$0xff]
    %v130 = vld [vmem:[#allocation2 + $0x180] sm:$0xff]
    %v131 = vld [vmem:[#allocation2 + $0x188] sm:$0xff]
    %v132 = vld [vmem:[#allocation2 + $0x190] sm:$0xff]
    %v133 = vld [vmem:[#allocation2 + $0x198] sm:$0xff]
    %v134 = vld [vmem:[#allocation2 + $0x1a0] sm:$0xff]
    %v135 = vld [vmem:[#allocation2 + $0x1a8] sm:$0xff]
    %v136 = vld [vmem:[#allocation2 + $0x1b0] sm:$0xff]
    %v137 = vld [vmem:[#allocation2 + $0x1b8] sm:$0xff]
    %v138 = vld [vmem:[#allocation2 + $0x1c0] sm:$0xff]
    %v139 = vld [vmem:[#allocation2 + $0x1c8] sm:$0xff]
    %v140 = vld [vmem:[#allocation2 + $0x1d0] sm:$0xff]
    %v141 = vld [vmem:[#allocation2 + $0x1d8] sm:$0xff]
    %v142 = vld [vmem:[#allocation2 + $0x1e0] sm:$0xff]
    %v143 = vld [vmem:[#allocation2 + $0x1e8] sm:$0xff]
    %v144 = vld [vmem:[#allocation2 + $0x1f0] sm:$0xff]
    %v145 = vld [vmem:[#allocation2 + $0x1f8] sm:$0xff]
    %v210 = vunpack.c.l.b16 %v82
    %v211 = vunpack.c.h.b16 %v82
    %v212 = vunpack.c.l.b16 %v83
    %v213 = vunpack.c.h.b16 %v83
    %v214 = vunpack.c.l.b16 %v84
    %v215 = vunpack.c.h.b16 %v84
    %v216 = vunpack.c.l.b16 %v85
    %v217 = vunpack.c.h.b16 %v85
    %v218 = vunpack.c.l.b16 %v86
    %v219 = vunpack.c.h.b16 %v86
    %v220 = vunpack.c.l.b16 %v87
    %v221 = vunpack.c.h.b16 %v87
    %v222 = vunpack.c.l.b16 %v88
    %v223 = vunpack.c.h.b16 %v88
    %v224 = vunpack.c.l.b16 %v89
    %v225 = vunpack.c.h.b16 %v89
    %v226 = vunpack.c.l.b16 %v90
    %v227 = vunpack.c.h.b16 %v90
    %v228 = vunpack.c.l.b16 %v91
    %v229 = vunpack.c.h.b16 %v91
    %v230 = vunpack.c.l.b16 %v92
    %v231 = vunpack.c.h.b16 %v92
    %v232 = vunpack.c.l.b16 %v93
    %v233 = vunpack.c.h.b16 %v93
    %v234 = vunpack.c.l.b16 %v94
    %v235 = vunpack.c.h.b16 %v94
    %v236 = vunpack.c.l.b16 %v95
    %v237 = vunpack.c.h.b16 %v95
    %v238 = vunpack.c.l.b16 %v96
    %v239 = vunpack.c.h.b16 %v96
    %v240 = vunpack.c.l.b16 %v97
    %v241 = vunpack.c.h.b16 %v97
    %v242 = vunpack.c.l.b16 %v98
    %v243 = vunpack.c.h.b16 %v98
    %v244 = vunpack.c.l.b16 %v99
    %v245 = vunpack.c.h.b16 %v99
    %v246 = vunpack.c.l.b16 %v100
    %v247 = vunpack.c.h.b16 %v100
    %v248 = vunpack.c.l.b16 %v101
    %v249 = vunpack.c.h.b16 %v101
    %v250 = vunpack.c.l.b16 %v102
    %v251 = vunpack.c.h.b16 %v102
    %v252 = vunpack.c.l.b16 %v103
    %v253 = vunpack.c.h.b16 %v103
    %v254 = vunpack.c.l.b16 %v104
    %v255 = vunpack.c.h.b16 %v104
    %v256 = vunpack.c.l.b16 %v105
    %v257 = vunpack.c.h.b16 %v105
    %v258 = vunpack.c.l.b16 %v106
    %v259 = vunpack.c.h.b16 %v106
    %v260 = vunpack.c.l.b16 %v107
    %v261 = vunpack.c.h.b16 %v107
    %v262 = vunpack.c.l.b16 %v108
    %v263 = vunpack.c.h.b16 %v108
    %v264 = vunpack.c.l.b16 %v109
    %v265 = vunpack.c.h.b16 %v109
    %v266 = vunpack.c.l.b16 %v110
    %v267 = vunpack.c.h.b16 %v110
    %v268 = vunpack.c.l.b16 %v111
    %v269 = vunpack.c.h.b16 %v111
    %v270 = vunpack.c.l.b16 %v112
    %v271 = vunpack.c.h.b16 %v112
    %v272 = vunpack.c.l.b16 %v113
    %v273 = vunpack.c.h.b16 %v113
    %v274 = vunpack.c.l.b16 %v114
    %v275 = vunpack.c.h.b16 %v114
    %v276 = vunpack.c.l.b16 %v115
    %v277 = vunpack.c.h.b16 %v115
    %v278 = vunpack.c.l.b16 %v116
    %v279 = vunpack.c.h.b16 %v116
    %v280 = vunpack.c.l.b16 %v117
    %v281 = vunpack.c.h.b16 %v117
    %v282 = vunpack.c.l.b16 %v118
    %v283 = vunpack.c.h.b16 %v118
    %v284 = vunpack.c.l.b16 %v119
    %v285 = vunpack.c.h.b16 %v119
    %v286 = vunpack.c.l.b16 %v120
    %v287 = vunpack.c.h.b16 %v120
    %v288 = vunpack.c.l.b16 %v121
    %v289 = vunpack.c.h.b16 %v121
    %v290 = vunpack.c.l.b16 %v122
    %v291 = vunpack.c.h.b16 %v122
    %v292 = vunpack.c.l.b16 %v123
    %v293 = vunpack.c.h.b16 %v123
    %v294 = vunpack.c.l.b16 %v124
    %v295 = vunpack.c.h.b16 %v124
    %v296 = vunpack.c.l.b16 %v125
    %v297 = vunpack.c.h.b16 %v125
    %v298 = vunpack.c.l.b16 %v126
    %v299 = vunpack.c.h.b16 %v126
    %v300 = vunpack.c.l.b16 %v127
    %v301 = vunpack.c.h.b16 %v127
    %v302 = vunpack.c.l.b16 %v128
    %v303 = vunpack.c.h.b16 %v128
    %v304 = vunpack.c.l.b16 %v129
    %v305 = vunpack.c.h.b16 %v129
    %v306 = vunpack.c.l.b16 %v130
    %v307 = vunpack.c.h.b16 %v130
    %v308 = vunpack.c.l.b16 %v131
    %v309 = vunpack.c.h.b16 %v131
    %v310 = vunpack.c.l.b16 %v132
    %v311 = vunpack.c.h.b16 %v132
    %v312 = vunpack.c.l.b16 %v133
    %v313 = vunpack.c.h.b16 %v133
    %v314 = vunpack.c.l.b16 %v134
    %v315 = vunpack.c.h.b16 %v134
    %v316 = vunpack.c.l.b16 %v135
    %v317 = vunpack.c.h.b16 %v135
    %v318 = vunpack.c.l.b16 %v136
    %v319 = vunpack.c.h.b16 %v136
    %v320 = vunpack.c.l.b16 %v137
    %v321 = vunpack.c.h.b16 %v137
    %v322 = vunpack.c.l.b16 %v138
    %v323 = vunpack.c.h.b16 %v138
    %v324 = vunpack.c.l.b16 %v139
    %v325 = vunpack.c.h.b16 %v139
    %v326 = vunpack.c.l.b16 %v140
    %v327 = vunpack.c.h.b16 %v140
    %v328 = vunpack.c.l.b16 %v141
    %v329 = vunpack.c.h.b16 %v141
    %v330 = vunpack.c.l.b16 %v142
    %v331 = vunpack.c.h.b16 %v142
    %v332 = vunpack.c.l.b16 %v143
    %v333 = vunpack.c.h.b16 %v143
    %v334 = vunpack.c.l.b16 %v144
    %v335 = vunpack.c.h.b16 %v144
    %v336 = vunpack.c.l.b16 %v145
    %v337 = vunpack.c.h.b16 %v145
    %v338 = vpack.c.b16 %v214, %v210
    %v339 = vpack.c.b16 %v215, %v211
    %v340 = vpack.c.b16 %v216, %v212
    %v341 = vpack.c.b16 %v217, %v213
    %v342 = vpack.c.b16 %v222, %v218
    %v343 = vpack.c.b16 %v223, %v219
    %v344 = vpack.c.b16 %v224, %v220
    %v345 = vpack.c.b16 %v225, %v221
    %v346 = vpack.c.b16 %v230, %v226
    %v347 = vpack.c.b16 %v231, %v227
    %v348 = vpack.c.b16 %v232, %v228
    %v349 = vpack.c.b16 %v233, %v229
    %v350 = vpack.c.b16 %v238, %v234
    %v351 = vpack.c.b16 %v239, %v235
    %v352 = vpack.c.b16 %v240, %v236
    %v353 = vpack.c.b16 %v241, %v237
    %v354 = vpack.c.b16 %v246, %v242
    %v355 = vpack.c.b16 %v247, %v243
    %v356 = vpack.c.b16 %v248, %v244
    %v357 = vpack.c.b16 %v249, %v245
    %v358 = vpack.c.b16 %v254, %v250
    %v359 = vpack.c.b16 %v255, %v251
    %v360 = vpack.c.b16 %v256, %v252
    %v361 = vpack.c.b16 %v257, %v253
    %v362 = vpack.c.b16 %v262, %v258
    %v363 = vpack.c.b16 %v263, %v259
    %v364 = vpack.c.b16 %v264, %v260
    %v365 = vpack.c.b16 %v265, %v261
    %v366 = vpack.c.b16 %v270, %v266
    %v367 = vpack.c.b16 %v271, %v267
    %v368 = vpack.c.b16 %v272, %v268
    %v369 = vpack.c.b16 %v273, %v269
    %v370 = vpack.c.b16 %v278, %v274
    %v371 = vpack.c.b16 %v279, %v275
    %v372 = vpack.c.b16 %v280, %v276
    %v373 = vpack.c.b16 %v281, %v277
    %v374 = vpack.c.b16 %v286, %v282
    %v375 = vpack.c.b16 %v287, %v283
    %v376 = vpack.c.b16 %v288, %v284
    %v377 = vpack.c.b16 %v289, %v285
    %v378 = vpack.c.b16 %v294, %v290
    %v379 = vpack.c.b16 %v295, %v291
    %v380 = vpack.c.b16 %v296, %v292
    %v381 = vpack.c.b16 %v297, %v293
    %v382 = vpack.c.b16 %v302, %v298
    %v383 = vpack.c.b16 %v303, %v299
    %v384 = vpack.c.b16 %v304, %v300
    %v385 = vpack.c.b16 %v305, %v301
    %v386 = vpack.c.b16 %v310, %v306
    %v387 = vpack.c.b16 %v311, %v307
    %v388 = vpack.c.b16 %v312, %v308
    %v389 = vpack.c.b16 %v313, %v309
    %v390 = vpack.c.b16 %v318, %v314
    %v391 = vpack.c.b16 %v319, %v315
    %v392 = vpack.c.b16 %v320, %v316
    %v393 = vpack.c.b16 %v321, %v317
    %v394 = vpack.c.b16 %v326, %v322
    %v395 = vpack.c.b16 %v327, %v323
    %v396 = vpack.c.b16 %v328, %v324
    %v397 = vpack.c.b16 %v329, %v325
    %v398 = vpack.c.b16 %v334, %v330
    %v399 = vpack.c.b16 %v335, %v331
    %v400 = vpack.c.b16 %v336, %v332
    %v401 = vpack.c.b16 %v337, %v333
    %466 = vmatpush.bf16.msra.mxu0 %v366
    %467 = vmatpush.bf16.msra.mxu0 %v362
    %468 = vmatpush.bf16.msra.mxu0 %v358
    %469 = vmatpush.bf16.msra.mxu0 %v354
    %470 = vmatpush.bf16.msra.mxu0 %v350
    %471 = vmatpush.bf16.msra.mxu0 %v346
    %472 = vmatpush.bf16.msra.mxu0 %v342
    %473 = vmatpush.bf16.msra.mxu0 %v338
    %474 = vmatmul.bf16.gmra.mxu0 %v74
    %v475 = vpop.f32.mrf.mxu0
    %v476 = vadd.f32 0.0, %v475
    %v477 = vpop.f32.mrf.mxu0
    %v478 = vadd.f32 0.0, %v477
    %479 = vmatmul.bf16.gmra.mxu0 %v76
    %v480 = vpop.f32.mrf.mxu0
    %v481 = vadd.f32 0.0, %v480
    %v482 = vpop.f32.mrf.mxu0
    %v483 = vadd.f32 0.0, %v482
    %484 = vmatmul.bf16.gmra.mxu0 %v78
    %v485 = vpop.f32.mrf.mxu0
    %v486 = vadd.f32 0.0, %v485
    %v487 = vpop.f32.mrf.mxu0
    %v488 = vadd.f32 0.0, %v487
    %489 = vmatmul.bf16.gmra.mxu0 %v80
    %v490 = vpop.f32.mrf.mxu0
    %v491 = vadd.f32 0.0, %v490
    %v492 = vpop.f32.mrf.mxu0
    %v493 = vadd.f32 0.0, %v492
    %494 = vdwg.mxu0
    %495 = vmatpush.bf16.msra.mxu0 %v398
    %496 = vmatpush.bf16.msra.mxu0 %v394
    %497 = vmatpush.bf16.msra.mxu0 %v390
    %498 = vmatpush.bf16.msra.mxu0 %v386
    %499 = vmatpush.bf16.msra.mxu0 %v382
    %500 = vmatpush.bf16.msra.mxu0 %v378
    %501 = vmatpush.bf16.msra.mxu0 %v374
    %502 = vmatpush.bf16.msra.mxu0 %v370
    %503 = vmatmul.bf16.gmra.mxu0 %v75
    %v504 = vpop.f32.mrf.mxu0
    %v505 = vadd.f32 %v476, %v504
    %v506 = vpop.f32.mrf.mxu0
    %v507 = vadd.f32 %v478, %v506
    %508 = vmatmul.bf16.gmra.mxu0 %v77
    %v509 = vpop.f32.mrf.mxu0
    %v510 = vadd.f32 %v481, %v509
    %v511 = vpop.f32.mrf.mxu0
    %v512 = vadd.f32 %v483, %v511
    %513 = vmatmul.bf16.gmra.mxu0 %v79
    %v514 = vpop.f32.mrf.mxu0
    %v515 = vadd.f32 %v486, %v514
    %v516 = vpop.f32.mrf.mxu0
    %v517 = vadd.f32 %v488, %v516
    %518 = vmatmul.bf16.gmra.mxu0 %v81
    %v519 = vpop.f32.mrf.mxu0
    %v520 = vadd.f32 %v491, %v519
    %v521 = vpop.f32.mrf.mxu0
    %v522 = vadd.f32 %v493, %v521
    %523 = vdwg.mxu0
    %524 = vmatpush.bf16.msra.mxu0 %v367
    %525 = vmatpush.bf16.msra.mxu0 %v363
    %526 = vmatpush.bf16.msra.mxu0 %v359
    %527 = vmatpush.bf16.msra.mxu0 %v355
    %528 = vmatpush.bf16.msra.mxu0 %v351
    %529 = vmatpush.bf16.msra.mxu0 %v347
    %530 = vmatpush.bf16.msra.mxu0 %v343
    %531 = vmatpush.bf16.msra.mxu0 %v339
    %532 = vmatmul.bf16.gmra.mxu0 %v74
    %v533 = vpop.f32.mrf.mxu0
    %v534 = vadd.f32 0.0, %v533
    %v535 = vpop.f32.mrf.mxu0
    %v536 = vadd.f32 0.0, %v535
    %537 = vmatmul.bf16.gmra.mxu0 %v76
    %v538 = vpop.f32.mrf.mxu0
    %v539 = vadd.f32 0.0, %v538
    %v540 = vpop.f32.mrf.mxu0
    %v541 = vadd.f32 0.0, %v540
    %542 = vmatmul.bf16.gmra.mxu0 %v78
    %v543 = vpop.f32.mrf.mxu0
    %v544 = vadd.f32 0.0, %v543
    %v545 = vpop.f32.mrf.mxu0
    %v546 = vadd.f32 0.0, %v545
    %547 = vmatmul.bf16.gmra.mxu0 %v80
    %v548 = vpop.f32.mrf.mxu0
    %v549 = vadd.f32 0.0, %v548
    %v550 = vpop.f32.mrf.mxu0
    %v551 = vadd.f32 0.0, %v550
    %552 = vdwg.mxu0
    %553 = vmatpush.bf16.msra.mxu0 %v399
    %554 = vmatpush.bf16.msra.mxu0 %v395
    %555 = vmatpush.bf16.msra.mxu0 %v391
    %556 = vmatpush.bf16.msra.mxu0 %v387
    %557 = vmatpush.bf16.msra.mxu0 %v383
    %558 = vmatpush.bf16.msra.mxu0 %v379
    %559 = vmatpush.bf16.msra.mxu0 %v375
    %560 = vmatpush.bf16.msra.mxu0 %v371
    %561 = vmatmul.bf16.gmra.mxu0 %v75
    %v562 = vpop.f32.mrf.mxu0
    %v563 = vadd.f32 %v534, %v562
    %v564 = vpop.f32.mrf.mxu0
    %v565 = vadd.f32 %v536, %v564
    %566 = vmatmul.bf16.gmra.mxu0 %v77
    %v567 = vpop.f32.mrf.mxu0
    %v568 = vadd.f32 %v539, %v567
    %v569 = vpop.f32.mrf.mxu0
    %v570 = vadd.f32 %v541, %v569
    %571 = vmatmul.bf16.gmra.mxu0 %v79
    %v572 = vpop.f32.mrf.mxu0
    %v573 = vadd.f32 %v544, %v572
    %v574 = vpop.f32.mrf.mxu0
    %v575 = vadd.f32 %v546, %v574
    %576 = vmatmul.bf16.gmra.mxu0 %v81
    %v577 = vpop.f32.mrf.mxu0
    %v578 = vadd.f32 %v549, %v577
    %v579 = vpop.f32.mrf.mxu0
    %v580 = vadd.f32 %v551, %v579
    %581 = vdwg.mxu0
    %582 = vmatpush.bf16.msra.mxu0 %v368
    %583 = vmatpush.bf16.msra.mxu0 %v364
    %584 = vmatpush.bf16.msra.mxu0 %v360
    %585 = vmatpush.bf16.msra.mxu0 %v356
    %586 = vmatpush.bf16.msra.mxu0 %v352
    %587 = vmatpush.bf16.msra.mxu0 %v348
    %588 = vmatpush.bf16.msra.mxu0 %v344
    %589 = vmatpush.bf16.msra.mxu0 %v340
    %590 = vmatmul.bf16.gmra.mxu0 %v74
    %v591 = vpop.f32.mrf.mxu0
    %v592 = vadd.f32 0.0, %v591
    %v593 = vpop.f32.mrf.mxu0
    %v594 = vadd.f32 0.0, %v593
    %595 = vmatmul.bf16.gmra.mxu0 %v76
    %v596 = vpop.f32.mrf.mxu0
    %v597 = vadd.f32 0.0, %v596
    %v598 = vpop.f32.mrf.mxu0
    %v599 = vadd.f32 0.0, %v598
    %600 = vmatmul.bf16.gmra.mxu0 %v78
    %v601 = vpop.f32.mrf.mxu0
    %v602 = vadd.f32 0.0, %v601
    %v603 = vpop.f32.mrf.mxu0
    %v604 = vadd.f32 0.0, %v603
    %605 = vmatmul.bf16.gmra.mxu0 %v80
    %v606 = vpop.f32.mrf.mxu0
    %v607 = vadd.f32 0.0, %v606
    %v608 = vpop.f32.mrf.mxu0
    %v609 = vadd.f32 0.0, %v608
    %610 = vdwg.mxu0
    %611 = vmatpush.bf16.msra.mxu0 %v400
    %612 = vmatpush.bf16.msra.mxu0 %v396
    %613 = vmatpush.bf16.msra.mxu0 %v392
    %614 = vmatpush.bf16.msra.mxu0 %v388
    %615 = vmatpush.bf16.msra.mxu0 %v384
    %616 = vmatpush.bf16.msra.mxu0 %v380
    %617 = vmatpush.bf16.msra.mxu0 %v376
    %618 = vmatpush.bf16.msra.mxu0 %v372
    %619 = vmatmul.bf16.gmra.mxu0 %v75
    %v620 = vpop.f32.mrf.mxu0
    %v621 = vadd.f32 %v592, %v620
    %v622 = vpop.f32.mrf.mxu0
    %v623 = vadd.f32 %v594, %v622
    %624 = vmatmul.bf16.gmra.mxu0 %v77
    %v625 = vpop.f32.mrf.mxu0
    %v626 = vadd.f32 %v597, %v625
    %v627 = vpop.f32.mrf.mxu0
    %v628 = vadd.f32 %v599, %v627
    %629 = vmatmul.bf16.gmra.mxu0 %v79
    %v630 = vpop.f32.mrf.mxu0
    %v631 = vadd.f32 %v602, %v630
    %v632 = vpop.f32.mrf.mxu0
    %v633 = vadd.f32 %v604, %v632
    %634 = vmatmul.bf16.gmra.mxu0 %v81
    %v635 = vpop.f32.mrf.mxu0
    %v636 = vadd.f32 %v607, %v635
    %v637 = vpop.f32.mrf.mxu0
    %v638 = vadd.f32 %v609, %v637
    %639 = vdwg.mxu0
    %640 = vmatpush.bf16.msra.mxu0 %v369
    %641 = vmatpush.bf16.msra.mxu0 %v365
    %642 = vmatpush.bf16.msra.mxu0 %v361
    %643 = vmatpush.bf16.msra.mxu0 %v357
    %644 = vmatpush.bf16.msra.mxu0 %v353
    %645 = vmatpush.bf16.msra.mxu0 %v349
    %646 = vmatpush.bf16.msra.mxu0 %v345
    %647 = vmatpush.bf16.msra.mxu0 %v341
    %648 = vmatmul.bf16.gmra.mxu0 %v74
    %v649 = vpop.f32.mrf.mxu0
    %v650 = vadd.f32 0.0, %v649
    %v651 = vpop.f32.mrf.mxu0
    %v652 = vadd.f32 0.0, %v651
    %653 = vmatmul.bf16.gmra.mxu0 %v76
    %v654 = vpop.f32.mrf.mxu0
    %v655 = vadd.f32 0.0, %v654
    %v656 = vpop.f32.mrf.mxu0
    %v657 = vadd.f32 0.0, %v656
    %658 = vmatmul.bf16.gmra.mxu0 %v78
    %v659 = vpop.f32.mrf.mxu0
    %v660 = vadd.f32 0.0, %v659
    %v661 = vpop.f32.mrf.mxu0
    %v662 = vadd.f32 0.0, %v661
    %663 = vmatmul.bf16.gmra.mxu0 %v80
    %v664 = vpop.f32.mrf.mxu0
    %v665 = vadd.f32 0.0, %v664
    %v666 = vpop.f32.mrf.mxu0
    %v667 = vadd.f32 0.0, %v666
    %668 = vdwg.mxu0
    %669 = vmatpush.bf16.msra.mxu0 %v401
    %670 = vmatpush.bf16.msra.mxu0 %v397
    %671 = vmatpush.bf16.msra.mxu0 %v393
    %672 = vmatpush.bf16.msra.mxu0 %v389
    %673 = vmatpush.bf16.msra.mxu0 %v385
    %674 = vmatpush.bf16.msra.mxu0 %v381
    %675 = vmatpush.bf16.msra.mxu0 %v377
    %676 = vmatpush.bf16.msra.mxu0 %v373
    %677 = vmatmul.bf16.gmra.mxu0 %v75
    %v678 = vpop.f32.mrf.mxu0
    %v679 = vadd.f32 %v650, %v678
    %v680 = vpop.f32.mrf.mxu0
    %v681 = vadd.f32 %v652, %v680
    %682 = vmatmul.bf16.gmra.mxu0 %v77
    %v683 = vpop.f32.mrf.mxu0
    %v684 = vadd.f32 %v655, %v683
    %v685 = vpop.f32.mrf.mxu0
    %v686 = vadd.f32 %v657, %v685
    %687 = vmatmul.bf16.gmra.mxu0 %v79
    %v688 = vpop.f32.mrf.mxu0
    %v689 = vadd.f32 %v660, %v688
    %v690 = vpop.f32.mrf.mxu0
    %v691 = vadd.f32 %v662, %v690
    %692 = vmatmul.bf16.gmra.mxu0 %v81
    %v693 = vpop.f32.mrf.mxu0
    %v694 = vadd.f32 %v665, %v693
    %v695 = vpop.f32.mrf.mxu0
    %v696 = vadd.f32 %v667, %v695
    %697 = vdwg.mxu0
    %v698 = vadd.f32 %v505, %v507
    %v699 = vadd.f32 %v698, %v510
    %v700 = vadd.f32 %v699, %v512
    %v701 = vadd.f32 %v700, %v515
    %v702 = vadd.f32 %v701, %v517
    %v703 = vadd.f32 %v702, %v520
    %v704 = vadd.f32 %v703, %v522
    %v705 = vrot.slane %v704, 4
    %v706 = vadd.f32 %v704, %v705
    %v707 = vrot.slane %v706, 2
    %v708 = vadd.f32 %v706, %v707
    %v709 = vrot.slane %v708, 1
    %v710 = vadd.f32 %v708, %v709
    %v711 = vadd.f32 %v563, %v565
    %v712 = vadd.f32 %v711, %v568
    %v713 = vadd.f32 %v712, %v570
    %v714 = vadd.f32 %v713, %v573
    %v715 = vadd.f32 %v714, %v575
    %v716 = vadd.f32 %v715, %v578
    %v717 = vadd.f32 %v716, %v580
    %v718 = vrot.slane %v717, 4
    %v719 = vadd.f32 %v717, %v718
    %v720 = vrot.slane %v719, 2
    %v721 = vadd.f32 %v719, %v720
    %v722 = vrot.slane %v721, 1
    %v723 = vadd.f32 %v721, %v722
    %v724 = vadd.f32 %v621, %v623
    %v725 = vadd.f32 %v724, %v626
    %v726 = vadd.f32 %v725, %v628
    %v727 = vadd.f32 %v726, %v631
    %v728 = vadd.f32 %v727, %v633
    %v729 = vadd.f32 %v728, %v636
    %v730 = vadd.f32 %v729, %v638
    %v731 = vrot.slane %v730, 4
    %v732 = vadd.f32 %v730, %v731
    %v733 = vrot.slane %v732, 2
    %v734 = vadd.f32 %v732, %v733
    %v735 = vrot.slane %v734, 1
    %v736 = vadd.f32 %v734, %v735
    %v737 = vadd.f32 %v679, %v681
    %v738 = vadd.f32 %v737, %v684
    %v739 = vadd.f32 %v738, %v686
    %v740 = vadd.f32 %v739, %v689
    %v741 = vadd.f32 %v740, %v691
    %v742 = vadd.f32 %v741, %v694
    %v743 = vadd.f32 %v742, %v696
    %v744 = vrot.slane %v743, 4
    %v745 = vadd.f32 %v743, %v744
    %v746 = vrot.slane %v745, 2
    %v747 = vadd.f32 %v745, %v746
    %v748 = vrot.slane %v747, 1
    %v749 = vadd.f32 %v747, %v748
    %v750 = vrcp.pop 64.0
    %v751 = vmul.f32 64.0, %v750
    %v752 = vsub.f32 1.0, %v751
    %v753 = vmul.f32 %v750, %v752
    %v754 = vadd.f32 %v750, %v753
    %vm755 = vweird.f32 %v750
    %v756 = vsel %vm755, %v750, %v754
    %v757 = vmul.f32 %v710, %v756
    %v758 = vmul.f32 %v723, %v756
    %v759 = vmul.f32 %v736, %v756
    %v760 = vmul.f32 %v749, %v756
    %v761 = vsub.f32 %v505, %v757
    %v762 = vsub.f32 %v563, %v758
    %v763 = vsub.f32 %v621, %v759
    %v764 = vsub.f32 %v679, %v760
    %v765 = vsub.f32 %v507, %v757
    %v766 = vsub.f32 %v565, %v758
    %v767 = vsub.f32 %v623, %v759
    %v768 = vsub.f32 %v681, %v760
    %v769 = vsub.f32 %v510, %v757
    %v770 = vsub.f32 %v568, %v758
    %v771 = vsub.f32 %v626, %v759
    %v772 = vsub.f32 %v684, %v760
    %v773 = vsub.f32 %v512, %v757
    %v774 = vsub.f32 %v570, %v758
    %v775 = vsub.f32 %v628, %v759
    %v776 = vsub.f32 %v686, %v760
    %v777 = vsub.f32 %v515, %v757
    %v778 = vsub.f32 %v573, %v758
    %v779 = vsub.f32 %v631, %v759
    %v780 = vsub.f32 %v689, %v760
    %v781 = vsub.f32 %v517, %v757
    %v782 = vsub.f32 %v575, %v758
    %v783 = vsub.f32 %v633, %v759
    %v784 = vsub.f32 %v691, %v760
    %v785 = vsub.f32 %v520, %v757
    %v786 = vsub.f32 %v578, %v758
    %v787 = vsub.f32 %v636, %v759
    %v788 = vsub.f32 %v694, %v760
    %v789 = vsub.f32 %v522, %v757
    %v790 = vsub.f32 %v580, %v758
    %v791 = vsub.f32 %v638, %v759
    %v792 = vsub.f32 %v696, %v760
    %v793 = vmul.f32 %v761, %v761
    %v794 = vmul.f32 %v762, %v762
    %v795 = vmul.f32 %v763, %v763
    %v796 = vmul.f32 %v764, %v764
    %v797 = vmul.f32 %v765, %v765
    %v798 = vmul.f32 %v766, %v766
    %v799 = vmul.f32 %v767, %v767
    %v800 = vmul.f32 %v768, %v768
    %v801 = vmul.f32 %v769, %v769
    %v802 = vmul.f32 %v770, %v770
    %v803 = vmul.f32 %v771, %v771
    %v804 = vmul.f32 %v772, %v772
    %v805 = vmul.f32 %v773, %v773
    %v806 = vmul.f32 %v774, %v774
    %v807 = vmul.f32 %v775, %v775
    %v808 = vmul.f32 %v776, %v776
    %v809 = vmul.f32 %v777, %v777
    %v810 = vmul.f32 %v778, %v778
    %v811 = vmul.f32 %v779, %v779
    %v812 = vmul.f32 %v780, %v780
    %v813 = vmul.f32 %v781, %v781
    %v814 = vmul.f32 %v782, %v782
    %v815 = vmul.f32 %v783, %v783
    %v816 = vmul.f32 %v784, %v784
    %v817 = vmul.f32 %v785, %v785
    %v818 = vmul.f32 %v786, %v786
    %v819 = vmul.f32 %v787, %v787
    %v820 = vmul.f32 %v788, %v788
    %v821 = vmul.f32 %v789, %v789
    %v822 = vmul.f32 %v790, %v790
    %v823 = vmul.f32 %v791, %v791
    %v824 = vmul.f32 %v792, %v792
    %v825 = vadd.f32 %v793, %v797
    %v826 = vadd.f32 %v825, %v801
    %v827 = vadd.f32 %v826, %v805
    %v828 = vadd.f32 %v827, %v809
    %v829 = vadd.f32 %v828, %v813
    %v830 = vadd.f32 %v829, %v817
    %v831 = vadd.f32 %v830, %v821
    %v832 = vrot.slane %v831, 4
    %v833 = vadd.f32 %v831, %v832
    %v834 = vrot.slane %v833, 2
    %v835 = vadd.f32 %v833, %v834
    %v836 = vrot.slane %v835, 1
    %v837 = vadd.f32 %v835, %v836
    %v838 = vadd.f32 %v794, %v798
    %v839 = vadd.f32 %v838, %v802
    %v840 = vadd.f32 %v839, %v806
    %v841 = vadd.f32 %v840, %v810
    %v842 = vadd.f32 %v841, %v814
    %v843 = vadd.f32 %v842, %v818
    %v844 = vadd.f32 %v843, %v822
    %v845 = vrot.slane %v844, 4
    %v846 = vadd.f32 %v844, %v845
    %v847 = vrot.slane %v846, 2
    %v848 = vadd.f32 %v846, %v847
    %v849 = vrot.slane %v848, 1
    %v850 = vadd.f32 %v848, %v849
    %v851 = vadd.f32 %v795, %v799
    %v852 = vadd.f32 %v851, %v803
    %v853 = vadd.f32 %v852, %v807
    %v854 = vadd.f32 %v853, %v811
    %v855 = vadd.f32 %v854, %v815
    %v856 = vadd.f32 %v855, %v819
    %v857 = vadd.f32 %v856, %v823
    %v858 = vrot.slane %v857, 4
    %v859 = vadd.f32 %v857, %v858
    %v860 = vrot.slane %v859, 2
    %v861 = vadd.f32 %v859, %v860
    %v862 = vrot.slane %v861, 1
    %v863 = vadd.f32 %v861, %v862
    %v864 = vadd.f32 %v796, %v800
    %v865 = vadd.f32 %v864, %v804
    %v866 = vadd.f32 %v865, %v808
    %v867 = vadd.f32 %v866, %v812
    %v868 = vadd.f32 %v867, %v816
    %v869 = vadd.f32 %v868, %v820
    %v870 = vadd.f32 %v869, %v824
    %v871 = vrot.slane %v870, 4
    %v872 = vadd.f32 %v870, %v871
    %v873 = vrot.slane %v872, 2
    %v874 = vadd.f32 %v872, %v873
    %v875 = vrot.slane %v874, 1
    %v876 = vadd.f32 %v874, %v875
    %v877 = vmul.f32 %v837, %v756
    %v878 = vmul.f32 %v850, %v756
    %v879 = vmul.f32 %v863, %v756
    %v880 = vmul.f32 %v876, %v756
    %v881 = vadd.f32 %v877, 1e-05
    %v882 = vadd.f32 %v878, 1e-05
    %v883 = vadd.f32 %v879, 1e-05
    %v884 = vadd.f32 %v880, 1e-05
    %v885 = vrsqrt.pop %v881
    %v886 = vmul.f32 %v885, %v881
    %v887 = vmul.f32 %v886, %v885
    %v888 = vmul.f32 0.5, %v887
    %v889 = vsub.f32 1.5, %v888
    %v890 = vmul.f32 %v885, %v889
    %vm891 = vweird.f32 %v881
    %vm892 = vweird.f32 %v885
    %vm893 = vmor %vm891, %vm892
    %v894 = vsel %vm893, %v885, %v890
    %v895 = vrsqrt.pop %v882
    %v896 = vmul.f32 %v895, %v882
    %v897 = vmul.f32 %v896, %v895
    %v898 = vmul.f32 0.5, %v897
    %v899 = vsub.f32 1.5, %v898
    %v900 = vmul.f32 %v895, %v899
    %vm901 = vweird.f32 %v882
    %vm902 = vweird.f32 %v895
    %vm903 = vmor %vm901, %vm902
    %v904 = vsel %vm903, %v895, %v900
    %v905 = vrsqrt.pop %v883
    %v906 = vmul.f32 %v905, %v883
    %v907 = vmul.f32 %v906, %v905
    %v908 = vmul.f32 0.5, %v907
    %v909 = vsub.f32 1.5, %v908
    %v910 = vmul.f32 %v905, %v909
    %vm911 = vweird.f32 %v883
    %vm912 = vweird.f32 %v905
    %vm913 = vmor %vm911, %vm912
    %v914 = vsel %vm913, %v905, %v910
    %v915 = vrsqrt.pop %v884
    %v916 = vmul.f32 %v915, %v884
    %v917 = vmul.f32 %v916, %v915
    %v918 = vmul.f32 0.5, %v917
    %v919 = vsub.f32 1.5, %v918
    %v920 = vmul.f32 %v915, %v919
    %vm921 = vweird.f32 %v884
    %vm922 = vweird.f32 %v915
    %vm923 = vmor %vm921, %vm922
    %v924 = vsel %vm923, %v915, %v920
    %v925 = vmul.f32 %v761, %v894
    %v926 = vmul.f32 %v762, %v904
    %v927 = vmul.f32 %v763, %v914
    %v928 = vmul.f32 %v764, %v924
    %v929 = vmul.f32 %v765, %v894
    %v930 = vmul.f32 %v766, %v904
    %v931 = vmul.f32 %v767, %v914
    %v932 = vmul.f32 %v768, %v924
    %v933 = vmul.f32 %v769, %v894
    %v934 = vmul.f32 %v770, %v904
    %v935 = vmul.f32 %v771, %v914
    %v936 = vmul.f32 %v772, %v924
    %v937 = vmul.f32 %v773, %v894
    %v938 = vmul.f32 %v774, %v904
    %v939 = vmul.f32 %v775, %v914
    %v940 = vmul.f32 %v776, %v924
    %v941 = vmul.f32 %v777, %v894
    %v942 = vmul.f32 %v778, %v904
    %v943 = vmul.f32 %v779, %v914
    %v944 = vmul.f32 %v780, %v924
    %v945 = vmul.f32 %v781, %v894
    %v946 = vmul.f32 %v782, %v904
    %v947 = vmul.f32 %v783, %v914
    %v948 = vmul.f32 %v784, %v924
    %v949 = vmul.f32 %v785, %v894
    %v950 = vmul.f32 %v786, %v904
    %v951 = vmul.f32 %v787, %v914
    %v952 = vmul.f32 %v788, %v924
    %v953 = vmul.f32 %v789, %v894
    %v954 = vmul.f32 %v790, %v904
    %v955 = vmul.f32 %v791, %v914
    %v956 = vmul.f32 %v792, %v924
    %v957 = vld [vmem:[%s3] sm:$0xf]
    %v959 = vperm.slane %v957, 0
    %v960 = vperm.slane %v957, 1
    %v961 = vperm.slane %v957, 2
    %v962 = vperm.slane %v957, 3
    %v967 = vmul.f32 %v925, %v959
    %v968 = vmul.f32 %v926, %v960
    %v969 = vmul.f32 %v927, %v961
    %v970 = vmul.f32 %v928, %v962
    %v971 = vmul.f32 %v929, %v959
    %v972 = vmul.f32 %v930, %v960
    %v973 = vmul.f32 %v931, %v961
    %v974 = vmul.f32 %v932, %v962
    %v975 = vmul.f32 %v933, %v959
    %v976 = vmul.f32 %v934, %v960
    %v977 = vmul.f32 %v935, %v961
    %v978 = vmul.f32 %v936, %v962
    %v979 = vmul.f32 %v937, %v959
    %v980 = vmul.f32 %v938, %v960
    %v981 = vmul.f32 %v939, %v961
    %v982 = vmul.f32 %v940, %v962
    %v983 = vmul.f32 %v941, %v959
    %v984 = vmul.f32 %v942, %v960
    %v985 = vmul.f32 %v943, %v961
    %v986 = vmul.f32 %v944, %v962
    %v987 = vmul.f32 %v945, %v959
    %v988 = vmul.f32 %v946, %v960
    %v989 = vmul.f32 %v947, %v961
    %v990 = vmul.f32 %v948, %v962
    %v991 = vmul.f32 %v949, %v959
    %v992 = vmul.f32 %v950, %v960
    %v993 = vmul.f32 %v951, %v961
    %v994 = vmul.f32 %v952, %v962
    %v995 = vmul.f32 %v953, %v959
    %v996 = vmul.f32 %v954, %v960
    %v997 = vmul.f32 %v955, %v961
    %v998 = vmul.f32 %v956, %v962
    %v999 = vld [vmem:[%s4] sm:$0xf]
    %v1001 = vperm.slane %v999, 0
    %v1002 = vperm.slane %v999, 1
    %v1003 = vperm.slane %v999, 2
    %v1004 = vperm.slane %v999, 3
    %v1009 = vadd.f32 %v967, %v1001
    %v1010 = vadd.f32 %v968, %v1002
    %v1011 = vadd.f32 %v969, %v1003
    %v1012 = vadd.f32 %v970, %v1004
    %v1013 = vadd.f32 %v971, %v1001
    %v1014 = vadd.f32 %v972, %v1002
    %v1015 = vadd.f32 %v973, %v1003
    %v1016 = vadd.f32 %v974, %v1004
    %v1017 = vadd.f32 %v975, %v1001
    %v1018 = vadd.f32 %v976, %v1002
    %v1019 = vadd.f32 %v977, %v1003
    %v1020 = vadd.f32 %v978, %v1004
    %v1021 = vadd.f32 %v979, %v1001
    %v1022 = vadd.f32 %v980, %v1002
    %v1023 = vadd.f32 %v981, %v1003
    %v1024 = vadd.f32 %v982, %v1004
    %v1025 = vadd.f32 %v983, %v1001
    %v1026 = vadd.f32 %v984, %v1002
    %v1027 = vadd.f32 %v985, %v1003
    %v1028 = vadd.f32 %v986, %v1004
    %v1029 = vadd.f32 %v987, %v1001
    %v1030 = vadd.f32 %v988, %v1002
    %v1031 = vadd.f32 %v989, %v1003
    %v1032 = vadd.f32 %v990, %v1004
    %v1033 = vadd.f32 %v991, %v1001
    %v1034 = vadd.f32 %v992, %v1002
    %v1035 = vadd.f32 %v993, %v1003
    %v1036 = vadd.f32 %v994, %v1004
    %v1037 = vadd.f32 %v995, %v1001
    %v1038 = vadd.f32 %v996, %v1002
    %v1039 = vadd.f32 %v997, %v1003
    %v1040 = vadd.f32 %v998, %v1004
    %1041 = vst [vmem:[%s5] sm:$0xff] %v1009
    %1042 = vst [vmem:[%s5 + $0x8] sm:$0xff] %v1010
    %1043 = vst [vmem:[%s5 + $0x10] sm:$0xff] %v1011
    %1044 = vst [vmem:[%s5 + $0x18] sm:$0xff] %v1012
    %1045 = vst [vmem:[%s5 + $0x20] sm:$0xff] %v1013
    %1046 = vst [vmem:[%s5 + $0x28] sm:$0xff] %v1014
    %1047 = vst [vmem:[%s5 + $0x30] sm:$0xff] %v1015
    %1048 = vst [vmem:[%s5 + $0x38] sm:$0xff] %v1016
    %1049 = vst [vmem:[%s5 + $0x40] sm:$0xff] %v1017
    %1050 = vst [vmem:[%s5 + $0x48] sm:$0xff] %v1018
    %1051 = vst [vmem:[%s5 + $0x50] sm:$0xff] %v1019
    %1052 = vst [vmem:[%s5 + $0x58] sm:$0xff] %v1020
    %1053 = vst [vmem:[%s5 + $0x60] sm:$0xff] %v1021
    %1054 = vst [vmem:[%s5 + $0x68] sm:$0xff] %v1022
    %1055 = vst [vmem:[%s5 + $0x70] sm:$0xff] %v1023
    %1056 = vst [vmem:[%s5 + $0x78] sm:$0xff] %v1024
    %1057 = vst [vmem:[%s5 + $0x80] sm:$0xff] %v1025
    %1058 = vst [vmem:[%s5 + $0x88] sm:$0xff] %v1026
    %1059 = vst [vmem:[%s5 + $0x90] sm:$0xff] %v1027
    %1060 = vst [vmem:[%s5 + $0x98] sm:$0xff] %v1028
    %1061 = vst [vmem:[%s5 + $0xa0] sm:$0xff] %v1029
    %1062 = vst [vmem:[%s5 + $0xa8] sm:$0xff] %v1030
    %1063 = vst [vmem:[%s5 + $0xb0] sm:$0xff] %v1031
    %1064 = vst [vmem:[%s5 + $0xb8] sm:$0xff] %v1032
    %1065 = vst [vmem:[%s5 + $0xc0] sm:$0xff] %v1033
    %1066 = vst [vmem:[%s5 + $0xc8] sm:$0xff] %v1034
    %1067 = vst [vmem:[%s5 + $0xd0] sm:$0xff] %v1035
    %1068 = vst [vmem:[%s5 + $0xd8] sm:$0xff] %v1036
    %1069 = vst [vmem:[%s5 + $0xe0] sm:$0xff] %v1037
    %1070 = vst [vmem:[%s5 + $0xe8] sm:$0xff] %v1038
    %1071 = vst [vmem:[%s5 + $0xf0] sm:$0xff] %v1039
    %1072 = vst [vmem:[%s5 + $0xf8] sm:$0xff] %v1040
    // Predicated region
    $region26: #{module_forward.3} parent=1 // pred_check
      _
    $region27: #{module_forward.3} parent=1 // pred_check_branch
      %1074 = sbr.rel (0) target = $region29
    $region28: #{module_forward.3} parent=1 // pred_region
      _
    $region29: #{module_forward.3} parent=1 // pred_fallthru
      _
    // Predicated region
    $region30: #{module_forward.3} parent=1 // pred_check
      _
    $region31: #{module_forward.3} parent=1 // pred_check_branch
      %1076 = sbr.rel (0) target = $region33
    $region32: #{module_forward.3} parent=1 // pred_region
      _
    $region33: #{module_forward.3} parent=1 // pred_fallthru
      _
    %1077 = vsyncpa [#allocation3], 1

</llo_original>
